<compile_context>
chip_gen: v5e
topology: v5e:2x2
jax: 0.10.0
libtpu: 0.0.40
codegen_flags: <defaults>
</compile_context>

<pallas_src>
import functools

import jax
import jax.numpy as jnp
from jax.experimental import pallas as pl
from jax.experimental.pallas import tpu as pltpu

K = 7                 # spatial kernel size
P = (K - 1) // 2      # padding = 3
KK = K * K


def _spatial_attn_kernel(wm_ref, x_ref, o_ref, *, W):
    """wm_ref: VMEM (2*K*K, HW) boundary-masked per-tap conv weights
               (rows [0:KK] -> avg channel, rows [KK:2*KK] -> max channel).
       x_ref:  VMEM (Bt, C, HW) one batch tile, lane-dense.
       o_ref:  VMEM (Bt, HW) attention map output."""
    Bt, C, HW = x_ref.shape
    inv_c = jnp.float32(1.0 / C)

    # Channel pooling for the whole batch tile (sublane reductions, f32 compute).
    x = x_ref[...].astype(jnp.float32)                     # (Bt, C, HW)
    avg = jnp.sum(x, axis=1) * inv_c                       # (Bt, HW)
    mx = jnp.max(x, axis=1)                                # (Bt, HW)

    # Pack both pooled channels along the sublane axis: one roll per tap covers both.
    stacked = jnp.concatenate([avg, mx], axis=0)           # (2*Bt, HW)

    # 7x7 "same" conv in flat layout:
    #   out[f] += w_masked[c, dy, dx, f] * map_c[(f + s) mod HW],  s = (dy-P)*W + (dx-P)
    # Boundary taps are zero because the wrapper pre-zeroed their weights at the
    # corresponding output positions (this also neutralizes the roll wrap-around).
    zeros = jnp.zeros((Bt, HW), jnp.float32)
    acc = [zeros, zeros, zeros, zeros]                     # 4 independent chains

    for dy in range(K):
        for dx in range(K):
            t = dy * K + dx
            s = (dy - P) * W + (dx - P)
            shift = (-s) % HW
            rolled = stacked if shift == 0 else pltpu.roll(stacked, shift=shift, axis=1)
            wa = wm_ref[pl.ds(t, 1), :]                    # (1, HW) avg-channel tap weight
            wx = wm_ref[pl.ds(KK + t, 1), :]               # (1, HW) max-channel tap weight
            k = t & 1
            acc[k] = acc[k] + wa * rolled[:Bt]
            acc[2 + k] = acc[2 + k] + wx * rolled[Bt:]

    conv = (acc[0] + acc[1]) + (acc[2] + acc[3])           # (Bt, HW)
    o_ref[...] = jax.nn.sigmoid(conv).astype(o_ref.dtype)


def _masked_tap_weights(wsp, H, W):
    """Fuse the conv weights with the 'same'-padding boundary masks, evaluated at
    every flat output position. Returns (2*K*K, H*W) f32."""
    HW = H * W
    f = jnp.arange(HW, dtype=jnp.int32)
    row = f // W
    col = f % W
    d = jnp.arange(K, dtype=jnp.int32) - P                              # (K,)
    rvalid = (row[None, :] + d[:, None] >= 0) & (row[None, :] + d[:, None] <= H - 1)  # (K, HW)
    cvalid = (col[None, :] + d[:, None] >= 0) & (col[None, :] + d[:, None] <= W - 1)  # (K, HW)
    mask = (rvalid[:, None, :] & cvalid[None, :, :]).reshape(KK, HW)                  # (KK, HW)
    w2 = wsp.reshape(2, KK).astype(jnp.float32)                                        # (2, KK)
    wm = jnp.where(mask[None, :, :], w2[:, :, None], 0.0)                              # (2, KK, HW)
    return wm.reshape(2 * KK, HW)


def _pick_batch_tile(B, requested):
    """Largest divisor of B that is <= requested and keeps the (Bt, HW) output
    block sublane-legal (Bt % 8 == 0 or Bt == B)."""
    cap = min(max(1, requested), B)
    for bt in range(cap, 0, -1):
        if B % bt == 0 and (bt % 8 == 0 or bt == B):
            return bt
    return B


def spatial_attention_pallas(x, wsp, *, batch_tile=8):
    """x: (B, C, H, W) float32 or bfloat16.  wsp: (2, K, K) (or (1, 2, K, K)) conv weight.
    Returns (B, 1, H, W) = sigmoid(conv7x7([mean_c(x), max_c(x)]))."""
    B, C, H, W = x.shape
    HW = H * W

    Bt = _pick_batch_tile(B, batch_tile)
    x_flat = x.reshape(B, C, HW)                              # lane-dense layout
    wm = _masked_tap_weights(wsp, H, W)                       # (2*KK, HW) masked taps

    kernel = functools.partial(_spatial_attn_kernel, W=W)

    itemsize = jnp.dtype(x.dtype).itemsize
    # Derive the VMEM limit from the actual double-buffered tile footprint.
    tile_in = Bt * C * HW * itemsize
    tile_out = Bt * HW * itemsize
    tile_w = ((2 * KK + 7) // 8) * 8 * HW * 4                 # sublane-padded weight buffer
    vmem_limit = int(min(max(2 * (tile_in + tile_out + tile_w) + (4 << 20), 16 << 20),
                         96 << 20))

    # Memory-bound: dominant traffic is reading x once.
    cost = pl.CostEstimate(
        flops=int(B * HW * (2 * C + 4 * KK)),
        transcendentals=int(B * HW),
        bytes_accessed=int(B * C * HW * itemsize + B * HW * itemsize + 2 * KK * HW * 4),
    )

    out_flat = pl.pallas_call(
        kernel,
        out_shape=jax.ShapeDtypeStruct((B, HW), x.dtype),
        grid_spec=pltpu.PrefetchScalarGridSpec(
            num_scalar_prefetch=0,
            grid=(B // Bt,),
            in_specs=[
                pl.BlockSpec((2 * KK, HW), lambda b: (0, 0)),     # masked tap weights (reused)
                pl.BlockSpec((Bt, C, HW), lambda b: (b, 0, 0)),   # x tile (dense lanes)
            ],
            out_specs=pl.BlockSpec((Bt, HW), lambda b: (b, 0)),
        ),
        compiler_params=pltpu.CompilerParams(
            dimension_semantics=("parallel",),       # batch tiles -> both TCs on v7x
            vmem_limit_bytes=vmem_limit,
        ),
        cost_estimate=cost,
    )(wm, x_flat)

    return out_flat.reshape(B, 1, H, W)


def spatial_attention_ref(x, wsp):
    """Pure-JAX reference matching the PyTorch SpatialAttention forward."""
    avg = x.mean(axis=1, keepdims=True)
    mx = x.max(axis=1, keepdims=True)
    s = jnp.concatenate([avg, mx], axis=1)                    # (B, 2, H, W)
    conv = jax.lax.conv_general_dilated(
        s, wsp.reshape(1, 2, K, K), window_strides=(1, 1),
        padding=[(P, P), (P, P)],
        dimension_numbers=("NCHW", "OIHW", "NCHW"))
    return jax.nn.sigmoid(conv)


if __name__ == "__main__":
    B, C, H, W = 2, 32, 16, 16

    key = jax.random.PRNGKey(0)
    kx, kw = jax.random.split(key, 2)
    x = jax.random.normal(kx, (B, C, H, W), dtype=jnp.float32)
    wsp = jax.random.normal(kw, (2, K, K), dtype=jnp.float32) * 0.1

    out = jax.block_until_ready(spatial_attention_pallas(x, wsp))
    ref = jax.block_until_ready(spatial_attention_ref(x, wsp))

    assert out.shape == (B, 1, H, W)
    assert jnp.allclose(out, ref, rtol=1e-4, atol=1e-4), "mismatch vs reference"
    print("KERNEL_OK")
</pallas_src>

<mosaic_0001>
module attributes {stable_mosaic.version = 11 : i64} {
  func.func @_spatial_attn_kernel(%arg0: i32, %arg1: memref<98x256xf32, #tpu.memory_space<vmem>>, %arg2: memref<2x32x256xf32, #tpu.memory_space<vmem>>, %arg3: memref<2x256xf32, #tpu.memory_space<vmem>>) attributes {dimension_semantics = [#tpu.dimension_semantics<parallel>], iteration_bounds = array<i64: 1>, scalar_prefetch = 0 : i64, scratch_operands = 0 : i64, tpu.core_type = #tpu.core_type<tc>, window_params = [{pipeline_mode = #tpu.pipeline_mode<synchronous>, transform_indices = @transform_0, window_bounds = array<i64: 98, 256>}, {transform_indices = @transform_1, window_bounds = array<i64: 2, 32, 256>}, {transform_indices = @transform_2, window_bounds = array<i64: 2, 256>}]} {
    %c0 = arith.constant 0 : index
    %c0_0 = arith.constant 0 : index
    %c0_1 = arith.constant 0 : index
    %0 = vector.load %arg2[%c0, %c0_0, %c0_1] : memref<2x32x256xf32, #tpu.memory_space<vmem>>, vector<2x32x256xf32>
    %cst = arith.constant dense<0.000000e+00> : vector<2x256xf32>
    %1 = vector.multi_reduction <add>, %0, %cst [1] : vector<2x32x256xf32> to vector<2x256xf32>
    %cst_2 = arith.constant 3.125000e-02 : f32
    %2 = vector.broadcast %cst_2 : f32 to vector<2x256xf32>
    %3 = arith.mulf %1, %2 : vector<2x256xf32>
    %cst_3 = arith.constant dense<0xFF800000> : vector<2x256xf32>
    %4 = vector.multi_reduction <maximumf>, %0, %cst_3 [1] : vector<2x32x256xf32> to vector<2x256xf32>
    %5 = tpu.concatenate %3, %4 in 0 : vector<2x256xf32>, vector<2x256xf32> -> vector<4x256xf32>
    %cst_4 = arith.constant 0.000000e+00 : f32
    %6 = vector.broadcast %cst_4 : f32 to vector<2x256xf32>
    %c51_i32 = arith.constant 51 : i32
    %7 = tpu.dynamic_rotate %5 by %c51_i32 dim 1 : vector<4x256xf32>, i32 -> vector<4x256xf32>
    %c0_5 = arith.constant 0 : index
    %c0_6 = arith.constant 0 : index
    %8 = vector.load %arg1[%c0_5, %c0_6] : memref<98x256xf32, #tpu.memory_space<vmem>>, vector<1x256xf32>
    %c49 = arith.constant 49 : index
    %c0_7 = arith.constant 0 : index
    %9 = vector.load %arg1[%c49, %c0_7] : memref<98x256xf32, #tpu.memory_space<vmem>>, vector<1x256xf32>
    %10 = vector.extract_strided_slice %7 {offsets = [0, 0], sizes = [2, 256], strides = [1, 1]} : vector<4x256xf32> to vector<2x256xf32>
    %11 = vector.broadcast %8 : vector<1x256xf32> to vector<2x256xf32>
    %12 = arith.mulf %11, %10 : vector<2x256xf32>
    %13 = arith.addf %6, %12 : vector<2x256xf32>
    %14 = vector.extract_strided_slice %7 {offsets = [2, 0], sizes = [2, 256], strides = [1, 1]} : vector<4x256xf32> to vector<2x256xf32>
    %15 = vector.broadcast %9 : vector<1x256xf32> to vector<2x256xf32>
    %16 = arith.mulf %15, %14 : vector<2x256xf32>
    %17 = arith.addf %6, %16 : vector<2x256xf32>
    %c50_i32 = arith.constant 50 : i32
    %18 = tpu.dynamic_rotate %5 by %c50_i32 dim 1 : vector<4x256xf32>, i32 -> vector<4x256xf32>
    %c1 = arith.constant 1 : index
    %c0_8 = arith.constant 0 : index
    %19 = vector.load %arg1[%c1, %c0_8] : memref<98x256xf32, #tpu.memory_space<vmem>>, vector<1x256xf32>
    %c50 = arith.constant 50 : index
    %c0_9 = arith.constant 0 : index
    %20 = vector.load %arg1[%c50, %c0_9] : memref<98x256xf32, #tpu.memory_space<vmem>>, vector<1x256xf32>
    %21 = vector.extract_strided_slice %18 {offsets = [0, 0], sizes = [2, 256], strides = [1, 1]} : vector<4x256xf32> to vector<2x256xf32>
    %22 = vector.broadcast %19 : vector<1x256xf32> to vector<2x256xf32>
    %23 = arith.mulf %22, %21 : vector<2x256xf32>
    %24 = arith.addf %6, %23 : vector<2x256xf32>
    %25 = vector.extract_strided_slice %18 {offsets = [2, 0], sizes = [2, 256], strides = [1, 1]} : vector<4x256xf32> to vector<2x256xf32>
    %26 = vector.broadcast %20 : vector<1x256xf32> to vector<2x256xf32>
    %27 = arith.mulf %26, %25 : vector<2x256xf32>
    %28 = arith.addf %6, %27 : vector<2x256xf32>
    %c49_i32 = arith.constant 49 : i32
    %29 = tpu.dynamic_rotate %5 by %c49_i32 dim 1 : vector<4x256xf32>, i32 -> vector<4x256xf32>
    %c2 = arith.constant 2 : index
    %c0_10 = arith.constant 0 : index
    %30 = vector.load %arg1[%c2, %c0_10] : memref<98x256xf32, #tpu.memory_space<vmem>>, vector<1x256xf32>
    %c51 = arith.constant 51 : index
    %c0_11 = arith.constant 0 : index
    %31 = vector.load %arg1[%c51, %c0_11] : memref<98x256xf32, #tpu.memory_space<vmem>>, vector<1x256xf32>
    %32 = vector.extract_strided_slice %29 {offsets = [0, 0], sizes = [2, 256], strides = [1, 1]} : vector<4x256xf32> to vector<2x256xf32>
    %33 = vector.broadcast %30 : vector<1x256xf32> to vector<2x256xf32>
    %34 = arith.mulf %33, %32 : vector<2x256xf32>
    %35 = arith.addf %13, %34 : vector<2x256xf32>
    %36 = vector.extract_strided_slice %29 {offsets = [2, 0], sizes = [2, 256], strides = [1, 1]} : vector<4x256xf32> to vector<2x256xf32>
    %37 = vector.broadcast %31 : vector<1x256xf32> to vector<2x256xf32>
    %38 = arith.mulf %37, %36 : vector<2x256xf32>
    %39 = arith.addf %17, %38 : vector<2x256xf32>
    %c48_i32 = arith.constant 48 : i32
    %40 = tpu.dynamic_rotate %5 by %c48_i32 dim 1 : vector<4x256xf32>, i32 -> vector<4x256xf32>
    %c3 = arith.constant 3 : index
    %c0_12 = arith.constant 0 : index
    %41 = vector.load %arg1[%c3, %c0_12] : memref<98x256xf32, #tpu.memory_space<vmem>>, vector<1x256xf32>
    %c52 = arith.constant 52 : index
    %c0_13 = arith.constant 0 : index
    %42 = vector.load %arg1[%c52, %c0_13] : memref<98x256xf32, #tpu.memory_space<vmem>>, vector<1x256xf32>
    %43 = vector.extract_strided_slice %40 {offsets = [0, 0], sizes = [2, 256], strides = [1, 1]} : vector<4x256xf32> to vector<2x256xf32>
    %44 = vector.broadcast %41 : vector<1x256xf32> to vector<2x256xf32>
    %45 = arith.mulf %44, %43 : vector<2x256xf32>
    %46 = arith.addf %24, %45 : vector<2x256xf32>
    %47 = vector.extract_strided_slice %40 {offsets = [2, 0], sizes = [2, 256], strides = [1, 1]} : vector<4x256xf32> to vector<2x256xf32>
    %48 = vector.broadcast %42 : vector<1x256xf32> to vector<2x256xf32>
    %49 = arith.mulf %48, %47 : vector<2x256xf32>
    %50 = arith.addf %28, %49 : vector<2x256xf32>
    %c47_i32 = arith.constant 47 : i32
    %51 = tpu.dynamic_rotate %5 by %c47_i32 dim 1 : vector<4x256xf32>, i32 -> vector<4x256xf32>
    %c4 = arith.constant 4 : index
    %c0_14 = arith.constant 0 : index
    %52 = vector.load %arg1[%c4, %c0_14] : memref<98x256xf32, #tpu.memory_space<vmem>>, vector<1x256xf32>
    %c53 = arith.constant 53 : index
    %c0_15 = arith.constant 0 : index
    %53 = vector.load %arg1[%c53, %c0_15] : memref<98x256xf32, #tpu.memory_space<vmem>>, vector<1x256xf32>
    %54 = vector.extract_strided_slice %51 {offsets = [0, 0], sizes = [2, 256], strides = [1, 1]} : vector<4x256xf32> to vector<2x256xf32>
    %55 = vector.broadcast %52 : vector<1x256xf32> to vector<2x256xf32>
    %56 = arith.mulf %55, %54 : vector<2x256xf32>
    %57 = arith.addf %35, %56 : vector<2x256xf32>
    %58 = vector.extract_strided_slice %51 {offsets = [2, 0], sizes = [2, 256], strides = [1, 1]} : vector<4x256xf32> to vector<2x256xf32>
    %59 = vector.broadcast %53 : vector<1x256xf32> to vector<2x256xf32>
    %60 = arith.mulf %59, %58 : vector<2x256xf32>
    %61 = arith.addf %39, %60 : vector<2x256xf32>
    %c46_i32 = arith.constant 46 : i32
    %62 = tpu.dynamic_rotate %5 by %c46_i32 dim 1 : vector<4x256xf32>, i32 -> vector<4x256xf32>
    %c5 = arith.constant 5 : index
    %c0_16 = arith.constant 0 : index
    %63 = vector.load %arg1[%c5, %c0_16] : memref<98x256xf32, #tpu.memory_space<vmem>>, vector<1x256xf32>
    %c54 = arith.constant 54 : index
    %c0_17 = arith.constant 0 : index
    %64 = vector.load %arg1[%c54, %c0_17] : memref<98x256xf32, #tpu.memory_space<vmem>>, vector<1x256xf32>
    %65 = vector.extract_strided_slice %62 {offsets = [0, 0], sizes = [2, 256], strides = [1, 1]} : vector<4x256xf32> to vector<2x256xf32>
    %66 = vector.broadcast %63 : vector<1x256xf32> to vector<2x256xf32>
    %67 = arith.mulf %66, %65 : vector<2x256xf32>
    %68 = arith.addf %46, %67 : vector<2x256xf32>
    %69 = vector.extract_strided_slice %62 {offsets = [2, 0], sizes = [2, 256], strides = [1, 1]} : vector<4x256xf32> to vector<2x256xf32>
    %70 = vector.broadcast %64 : vector<1x256xf32> to vector<2x256xf32>
    %71 = arith.mulf %70, %69 : vector<2x256xf32>
    %72 = arith.addf %50, %71 : vector<2x256xf32>
    %c45_i32 = arith.constant 45 : i32
    %73 = tpu.dynamic_rotate %5 by %c45_i32 dim 1 : vector<4x256xf32>, i32 -> vector<4x256xf32>
    %c6 = arith.constant 6 : index
    %c0_18 = arith.constant 0 : index
    %74 = vector.load %arg1[%c6, %c0_18] : memref<98x256xf32, #tpu.memory_space<vmem>>, vector<1x256xf32>
    %c55 = arith.constant 55 : index
    %c0_19 = arith.constant 0 : index
    %75 = vector.load %arg1[%c55, %c0_19] : memref<98x256xf32, #tpu.memory_space<vmem>>, vector<1x256xf32>
    %76 = vector.extract_strided_slice %73 {offsets = [0, 0], sizes = [2, 256], strides = [1, 1]} : vector<4x256xf32> to vector<2x256xf32>
    %77 = vector.broadcast %74 : vector<1x256xf32> to vector<2x256xf32>
    %78 = arith.mulf %77, %76 : vector<2x256xf32>
    %79 = arith.addf %57, %78 : vector<2x256xf32>
    %80 = vector.extract_strided_slice %73 {offsets = [2, 0], sizes = [2, 256], strides = [1, 1]} : vector<4x256xf32> to vector<2x256xf32>
    %81 = vector.broadcast %75 : vector<1x256xf32> to vector<2x256xf32>
    %82 = arith.mulf %81, %80 : vector<2x256xf32>
    %83 = arith.addf %61, %82 : vector<2x256xf32>
    %c35_i32 = arith.constant 35 : i32
    %84 = tpu.dynamic_rotate %5 by %c35_i32 dim 1 : vector<4x256xf32>, i32 -> vector<4x256xf32>
    %c7 = arith.constant 7 : index
    %c0_20 = arith.constant 0 : index
    %85 = vector.load %arg1[%c7, %c0_20] : memref<98x256xf32, #tpu.memory_space<vmem>>, vector<1x256xf32>
    %c56 = arith.constant 56 : index
    %c0_21 = arith.constant 0 : index
    %86 = vector.load %arg1[%c56, %c0_21] : memref<98x256xf32, #tpu.memory_space<vmem>>, vector<1x256xf32>
    %87 = vector.extract_strided_slice %84 {offsets = [0, 0], sizes = [2, 256], strides = [1, 1]} : vector<4x256xf32> to vector<2x256xf32>
    %88 = vector.broadcast %85 : vector<1x256xf32> to vector<2x256xf32>
    %89 = arith.mulf %88, %87 : vector<2x256xf32>
    %90 = arith.addf %68, %89 : vector<2x256xf32>
    %91 = vector.extract_strided_slice %84 {offsets = [2, 0], sizes = [2, 256], strides = [1, 1]} : vector<4x256xf32> to vector<2x256xf32>
    %92 = vector.broadcast %86 : vector<1x256xf32> to vector<2x256xf32>
    %93 = arith.mulf %92, %91 : vector<2x256xf32>
    %94 = arith.addf %72, %93 : vector<2x256xf32>
    %c34_i32 = arith.constant 34 : i32
    %95 = tpu.dynamic_rotate %5 by %c34_i32 dim 1 : vector<4x256xf32>, i32 -> vector<4x256xf32>
    %c8 = arith.constant 8 : index
    %c0_22 = arith.constant 0 : index
    %96 = vector.load %arg1[%c8, %c0_22] : memref<98x256xf32, #tpu.memory_space<vmem>>, vector<1x256xf32>
    %c57 = arith.constant 57 : index
    %c0_23 = arith.constant 0 : index
    %97 = vector.load %arg1[%c57, %c0_23] : memref<98x256xf32, #tpu.memory_space<vmem>>, vector<1x256xf32>
    %98 = vector.extract_strided_slice %95 {offsets = [0, 0], sizes = [2, 256], strides = [1, 1]} : vector<4x256xf32> to vector<2x256xf32>
    %99 = vector.broadcast %96 : vector<1x256xf32> to vector<2x256xf32>
    %100 = arith.mulf %99, %98 : vector<2x256xf32>
    %101 = arith.addf %79, %100 : vector<2x256xf32>
    %102 = vector.extract_strided_slice %95 {offsets = [2, 0], sizes = [2, 256], strides = [1, 1]} : vector<4x256xf32> to vector<2x256xf32>
    %103 = vector.broadcast %97 : vector<1x256xf32> to vector<2x256xf32>
    %104 = arith.mulf %103, %102 : vector<2x256xf32>
    %105 = arith.addf %83, %104 : vector<2x256xf32>
    %c33_i32 = arith.constant 33 : i32
    %106 = tpu.dynamic_rotate %5 by %c33_i32 dim 1 : vector<4x256xf32>, i32 -> vector<4x256xf32>
    %c9 = arith.constant 9 : index
    %c0_24 = arith.constant 0 : index
    %107 = vector.load %arg1[%c9, %c0_24] : memref<98x256xf32, #tpu.memory_space<vmem>>, vector<1x256xf32>
    %c58 = arith.constant 58 : index
    %c0_25 = arith.constant 0 : index
    %108 = vector.load %arg1[%c58, %c0_25] : memref<98x256xf32, #tpu.memory_space<vmem>>, vector<1x256xf32>
    %109 = vector.extract_strided_slice %106 {offsets = [0, 0], sizes = [2, 256], strides = [1, 1]} : vector<4x256xf32> to vector<2x256xf32>
    %110 = vector.broadcast %107 : vector<1x256xf32> to vector<2x256xf32>
    %111 = arith.mulf %110, %109 : vector<2x256xf32>
    %112 = arith.addf %90, %111 : vector<2x256xf32>
    %113 = vector.extract_strided_slice %106 {offsets = [2, 0], sizes = [2, 256], strides = [1, 1]} : vector<4x256xf32> to vector<2x256xf32>
    %114 = vector.broadcast %108 : vector<1x256xf32> to vector<2x256xf32>
    %115 = arith.mulf %114, %113 : vector<2x256xf32>
    %116 = arith.addf %94, %115 : vector<2x256xf32>
    %c32_i32 = arith.constant 32 : i32
    %117 = tpu.dynamic_rotate %5 by %c32_i32 dim 1 : vector<4x256xf32>, i32 -> vector<4x256xf32>
    %c10 = arith.constant 10 : index
    %c0_26 = arith.constant 0 : index
    %118 = vector.load %arg1[%c10, %c0_26] : memref<98x256xf32, #tpu.memory_space<vmem>>, vector<1x256xf32>
    %c59 = arith.constant 59 : index
    %c0_27 = arith.constant 0 : index
    %119 = vector.load %arg1[%c59, %c0_27] : memref<98x256xf32, #tpu.memory_space<vmem>>, vector<1x256xf32>
    %120 = vector.extract_strided_slice %117 {offsets = [0, 0], sizes = [2, 256], strides = [1, 1]} : vector<4x256xf32> to vector<2x256xf32>
    %121 = vector.broadcast %118 : vector<1x256xf32> to vector<2x256xf32>
    %122 = arith.mulf %121, %120 : vector<2x256xf32>
    %123 = arith.addf %101, %122 : vector<2x256xf32>
    %124 = vector.extract_strided_slice %117 {offsets = [2, 0], sizes = [2, 256], strides = [1, 1]} : vector<4x256xf32> to vector<2x256xf32>
    %125 = vector.broadcast %119 : vector<1x256xf32> to vector<2x256xf32>
    %126 = arith.mulf %125, %124 : vector<2x256xf32>
    %127 = arith.addf %105, %126 : vector<2x256xf32>
    %c31_i32 = arith.constant 31 : i32
    %128 = tpu.dynamic_rotate %5 by %c31_i32 dim 1 : vector<4x256xf32>, i32 -> vector<4x256xf32>
    %c11 = arith.constant 11 : index
    %c0_28 = arith.constant 0 : index
    %129 = vector.load %arg1[%c11, %c0_28] : memref<98x256xf32, #tpu.memory_space<vmem>>, vector<1x256xf32>
    %c60 = arith.constant 60 : index
    %c0_29 = arith.constant 0 : index
    %130 = vector.load %arg1[%c60, %c0_29] : memref<98x256xf32, #tpu.memory_space<vmem>>, vector<1x256xf32>
    %131 = vector.extract_strided_slice %128 {offsets = [0, 0], sizes = [2, 256], strides = [1, 1]} : vector<4x256xf32> to vector<2x256xf32>
    %132 = vector.broadcast %129 : vector<1x256xf32> to vector<2x256xf32>
    %133 = arith.mulf %132, %131 : vector<2x256xf32>
    %134 = arith.addf %112, %133 : vector<2x256xf32>
    %135 = vector.extract_strided_slice %128 {offsets = [2, 0], sizes = [2, 256], strides = [1, 1]} : vector<4x256xf32> to vector<2x256xf32>
    %136 = vector.broadcast %130 : vector<1x256xf32> to vector<2x256xf32>
    %137 = arith.mulf %136, %135 : vector<2x256xf32>
    %138 = arith.addf %116, %137 : vector<2x256xf32>
    %c30_i32 = arith.constant 30 : i32
    %139 = tpu.dynamic_rotate %5 by %c30_i32 dim 1 : vector<4x256xf32>, i32 -> vector<4x256xf32>
    %c12 = arith.constant 12 : index
    %c0_30 = arith.constant 0 : index
    %140 = vector.load %arg1[%c12, %c0_30] : memref<98x256xf32, #tpu.memory_space<vmem>>, vector<1x256xf32>
    %c61 = arith.constant 61 : index
    %c0_31 = arith.constant 0 : index
    %141 = vector.load %arg1[%c61, %c0_31] : memref<98x256xf32, #tpu.memory_space<vmem>>, vector<1x256xf32>
    %142 = vector.extract_strided_slice %139 {offsets = [0, 0], sizes = [2, 256], strides = [1, 1]} : vector<4x256xf32> to vector<2x256xf32>
    %143 = vector.broadcast %140 : vector<1x256xf32> to vector<2x256xf32>
    %144 = arith.mulf %143, %142 : vector<2x256xf32>
    %145 = arith.addf %123, %144 : vector<2x256xf32>
    %146 = vector.extract_strided_slice %139 {offsets = [2, 0], sizes = [2, 256], strides = [1, 1]} : vector<4x256xf32> to vector<2x256xf32>
    %147 = vector.broadcast %141 : vector<1x256xf32> to vector<2x256xf32>
    %148 = arith.mulf %147, %146 : vector<2x256xf32>
    %149 = arith.addf %127, %148 : vector<2x256xf32>
    %c29_i32 = arith.constant 29 : i32
    %150 = tpu.dynamic_rotate %5 by %c29_i32 dim 1 : vector<4x256xf32>, i32 -> vector<4x256xf32>
    %c13 = arith.constant 13 : index
    %c0_32 = arith.constant 0 : index
    %151 = vector.load %arg1[%c13, %c0_32] : memref<98x256xf32, #tpu.memory_space<vmem>>, vector<1x256xf32>
    %c62 = arith.constant 62 : index
    %c0_33 = arith.constant 0 : index
    %152 = vector.load %arg1[%c62, %c0_33] : memref<98x256xf32, #tpu.memory_space<vmem>>, vector<1x256xf32>
    %153 = vector.extract_strided_slice %150 {offsets = [0, 0], sizes = [2, 256], strides = [1, 1]} : vector<4x256xf32> to vector<2x256xf32>
    %154 = vector.broadcast %151 : vector<1x256xf32> to vector<2x256xf32>
    %155 = arith.mulf %154, %153 : vector<2x256xf32>
    %156 = arith.addf %134, %155 : vector<2x256xf32>
    %157 = vector.extract_strided_slice %150 {offsets = [2, 0], sizes = [2, 256], strides = [1, 1]} : vector<4x256xf32> to vector<2x256xf32>
    %158 = vector.broadcast %152 : vector<1x256xf32> to vector<2x256xf32>
    %159 = arith.mulf %158, %157 : vector<2x256xf32>
    %160 = arith.addf %138, %159 : vector<2x256xf32>
    %c19_i32 = arith.constant 19 : i32
    %161 = tpu.dynamic_rotate %5 by %c19_i32 dim 1 : vector<4x256xf32>, i32 -> vector<4x256xf32>
    %c14 = arith.constant 14 : index
    %c0_34 = arith.constant 0 : index
    %162 = vector.load %arg1[%c14, %c0_34] : memref<98x256xf32, #tpu.memory_space<vmem>>, vector<1x256xf32>
    %c63 = arith.constant 63 : index
    %c0_35 = arith.constant 0 : index
    %163 = vector.load %arg1[%c63, %c0_35] : memref<98x256xf32, #tpu.memory_space<vmem>>, vector<1x256xf32>
    %164 = vector.extract_strided_slice %161 {offsets = [0, 0], sizes = [2, 256], strides = [1, 1]} : vector<4x256xf32> to vector<2x256xf32>
    %165 = vector.broadcast %162 : vector<1x256xf32> to vector<2x256xf32>
    %166 = arith.mulf %165, %164 : vector<2x256xf32>
    %167 = arith.addf %145, %166 : vector<2x256xf32>
    %168 = vector.extract_strided_slice %161 {offsets = [2, 0], sizes = [2, 256], strides = [1, 1]} : vector<4x256xf32> to vector<2x256xf32>
    %169 = vector.broadcast %163 : vector<1x256xf32> to vector<2x256xf32>
    %170 = arith.mulf %169, %168 : vector<2x256xf32>
    %171 = arith.addf %149, %170 : vector<2x256xf32>
    %c18_i32 = arith.constant 18 : i32
    %172 = tpu.dynamic_rotate %5 by %c18_i32 dim 1 : vector<4x256xf32>, i32 -> vector<4x256xf32>
    %c15 = arith.constant 15 : index
    %c0_36 = arith.constant 0 : index
    %173 = vector.load %arg1[%c15, %c0_36] : memref<98x256xf32, #tpu.memory_space<vmem>>, vector<1x256xf32>
    %c64 = arith.constant 64 : index
    %c0_37 = arith.constant 0 : index
    %174 = vector.load %arg1[%c64, %c0_37] : memref<98x256xf32, #tpu.memory_space<vmem>>, vector<1x256xf32>
    %175 = vector.extract_strided_slice %172 {offsets = [0, 0], sizes = [2, 256], strides = [1, 1]} : vector<4x256xf32> to vector<2x256xf32>
    %176 = vector.broadcast %173 : vector<1x256xf32> to vector<2x256xf32>
    %177 = arith.mulf %176, %175 : vector<2x256xf32>
    %178 = arith.addf %156, %177 : vector<2x256xf32>
    %179 = vector.extract_strided_slice %172 {offsets = [2, 0], sizes = [2, 256], strides = [1, 1]} : vector<4x256xf32> to vector<2x256xf32>
    %180 = vector.broadcast %174 : vector<1x256xf32> to vector<2x256xf32>
    %181 = arith.mulf %180, %179 : vector<2x256xf32>
    %182 = arith.addf %160, %181 : vector<2x256xf32>
    %c17_i32 = arith.constant 17 : i32
    %183 = tpu.dynamic_rotate %5 by %c17_i32 dim 1 : vector<4x256xf32>, i32 -> vector<4x256xf32>
    %c16 = arith.constant 16 : index
    %c0_38 = arith.constant 0 : index
    %184 = vector.load %arg1[%c16, %c0_38] : memref<98x256xf32, #tpu.memory_space<vmem>>, vector<1x256xf32>
    %c65 = arith.constant 65 : index
    %c0_39 = arith.constant 0 : index
    %185 = vector.load %arg1[%c65, %c0_39] : memref<98x256xf32, #tpu.memory_space<vmem>>, vector<1x256xf32>
    %186 = vector.extract_strided_slice %183 {offsets = [0, 0], sizes = [2, 256], strides = [1, 1]} : vector<4x256xf32> to vector<2x256xf32>
    %187 = vector.broadcast %184 : vector<1x256xf32> to vector<2x256xf32>
    %188 = arith.mulf %187, %186 : vector<2x256xf32>
    %189 = arith.addf %167, %188 : vector<2x256xf32>
    %190 = vector.extract_strided_slice %183 {offsets = [2, 0], sizes = [2, 256], strides = [1, 1]} : vector<4x256xf32> to vector<2x256xf32>
    %191 = vector.broadcast %185 : vector<1x256xf32> to vector<2x256xf32>
    %192 = arith.mulf %191, %190 : vector<2x256xf32>
    %193 = arith.addf %171, %192 : vector<2x256xf32>
    %c16_i32 = arith.constant 16 : i32
    %194 = tpu.dynamic_rotate %5 by %c16_i32 dim 1 : vector<4x256xf32>, i32 -> vector<4x256xf32>
    %c17 = arith.constant 17 : index
    %c0_40 = arith.constant 0 : index
    %195 = vector.load %arg1[%c17, %c0_40] : memref<98x256xf32, #tpu.memory_space<vmem>>, vector<1x256xf32>
    %c66 = arith.constant 66 : index
    %c0_41 = arith.constant 0 : index
    %196 = vector.load %arg1[%c66, %c0_41] : memref<98x256xf32, #tpu.memory_space<vmem>>, vector<1x256xf32>
    %197 = vector.extract_strided_slice %194 {offsets = [0, 0], sizes = [2, 256], strides = [1, 1]} : vector<4x256xf32> to vector<2x256xf32>
    %198 = vector.broadcast %195 : vector<1x256xf32> to vector<2x256xf32>
    %199 = arith.mulf %198, %197 : vector<2x256xf32>
    %200 = arith.addf %178, %199 : vector<2x256xf32>
    %201 = vector.extract_strided_slice %194 {offsets = [2, 0], sizes = [2, 256], strides = [1, 1]} : vector<4x256xf32> to vector<2x256xf32>
    %202 = vector.broadcast %196 : vector<1x256xf32> to vector<2x256xf32>
    %203 = arith.mulf %202, %201 : vector<2x256xf32>
    %204 = arith.addf %182, %203 : vector<2x256xf32>
    %c15_i32 = arith.constant 15 : i32
    %205 = tpu.dynamic_rotate %5 by %c15_i32 dim 1 : vector<4x256xf32>, i32 -> vector<4x256xf32>
    %c18 = arith.constant 18 : index
    %c0_42 = arith.constant 0 : index
    %206 = vector.load %arg1[%c18, %c0_42] : memref<98x256xf32, #tpu.memory_space<vmem>>, vector<1x256xf32>
    %c67 = arith.constant 67 : index
    %c0_43 = arith.constant 0 : index
    %207 = vector.load %arg1[%c67, %c0_43] : memref<98x256xf32, #tpu.memory_space<vmem>>, vector<1x256xf32>
    %208 = vector.extract_strided_slice %205 {offsets = [0, 0], sizes = [2, 256], strides = [1, 1]} : vector<4x256xf32> to vector<2x256xf32>
    %209 = vector.broadcast %206 : vector<1x256xf32> to vector<2x256xf32>
    %210 = arith.mulf %209, %208 : vector<2x256xf32>
    %211 = arith.addf %189, %210 : vector<2x256xf32>
    %212 = vector.extract_strided_slice %205 {offsets = [2, 0], sizes = [2, 256], strides = [1, 1]} : vector<4x256xf32> to vector<2x256xf32>
    %213 = vector.broadcast %207 : vector<1x256xf32> to vector<2x256xf32>
    %214 = arith.mulf %213, %212 : vector<2x256xf32>
    %215 = arith.addf %193, %214 : vector<2x256xf32>
    %c14_i32 = arith.constant 14 : i32
    %216 = tpu.dynamic_rotate %5 by %c14_i32 dim 1 : vector<4x256xf32>, i32 -> vector<4x256xf32>
    %c19 = arith.constant 19 : index
    %c0_44 = arith.constant 0 : index
    %217 = vector.load %arg1[%c19, %c0_44] : memref<98x256xf32, #tpu.memory_space<vmem>>, vector<1x256xf32>
    %c68 = arith.constant 68 : index
    %c0_45 = arith.constant 0 : index
    %218 = vector.load %arg1[%c68, %c0_45] : memref<98x256xf32, #tpu.memory_space<vmem>>, vector<1x256xf32>
    %219 = vector.extract_strided_slice %216 {offsets = [0, 0], sizes = [2, 256], strides = [1, 1]} : vector<4x256xf32> to vector<2x256xf32>
    %220 = vector.broadcast %217 : vector<1x256xf32> to vector<2x256xf32>
    %221 = arith.mulf %220, %219 : vector<2x256xf32>
    %222 = arith.addf %200, %221 : vector<2x256xf32>
    %223 = vector.extract_strided_slice %216 {offsets = [2, 0], sizes = [2, 256], strides = [1, 1]} : vector<4x256xf32> to vector<2x256xf32>
    %224 = vector.broadcast %218 : vector<1x256xf32> to vector<2x256xf32>
    %225 = arith.mulf %224, %223 : vector<2x256xf32>
    %226 = arith.addf %204, %225 : vector<2x256xf32>
    %c13_i32 = arith.constant 13 : i32
    %227 = tpu.dynamic_rotate %5 by %c13_i32 dim 1 : vector<4x256xf32>, i32 -> vector<4x256xf32>
    %c20 = arith.constant 20 : index
    %c0_46 = arith.constant 0 : index
    %228 = vector.load %arg1[%c20, %c0_46] : memref<98x256xf32, #tpu.memory_space<vmem>>, vector<1x256xf32>
    %c69 = arith.constant 69 : index
    %c0_47 = arith.constant 0 : index
    %229 = vector.load %arg1[%c69, %c0_47] : memref<98x256xf32, #tpu.memory_space<vmem>>, vector<1x256xf32>
    %230 = vector.extract_strided_slice %227 {offsets = [0, 0], sizes = [2, 256], strides = [1, 1]} : vector<4x256xf32> to vector<2x256xf32>
    %231 = vector.broadcast %228 : vector<1x256xf32> to vector<2x256xf32>
    %232 = arith.mulf %231, %230 : vector<2x256xf32>
    %233 = arith.addf %211, %232 : vector<2x256xf32>
    %234 = vector.extract_strided_slice %227 {offsets = [2, 0], sizes = [2, 256], strides = [1, 1]} : vector<4x256xf32> to vector<2x256xf32>
    %235 = vector.broadcast %229 : vector<1x256xf32> to vector<2x256xf32>
    %236 = arith.mulf %235, %234 : vector<2x256xf32>
    %237 = arith.addf %215, %236 : vector<2x256xf32>
    %c3_i32 = arith.constant 3 : i32
    %238 = tpu.dynamic_rotate %5 by %c3_i32 dim 1 : vector<4x256xf32>, i32 -> vector<4x256xf32>
    %c21 = arith.constant 21 : index
    %c0_48 = arith.constant 0 : index
    %239 = vector.load %arg1[%c21, %c0_48] : memref<98x256xf32, #tpu.memory_space<vmem>>, vector<1x256xf32>
    %c70 = arith.constant 70 : index
    %c0_49 = arith.constant 0 : index
    %240 = vector.load %arg1[%c70, %c0_49] : memref<98x256xf32, #tpu.memory_space<vmem>>, vector<1x256xf32>
    %241 = vector.extract_strided_slice %238 {offsets = [0, 0], sizes = [2, 256], strides = [1, 1]} : vector<4x256xf32> to vector<2x256xf32>
    %242 = vector.broadcast %239 : vector<1x256xf32> to vector<2x256xf32>
    %243 = arith.mulf %242, %241 : vector<2x256xf32>
    %244 = arith.addf %222, %243 : vector<2x256xf32>
    %245 = vector.extract_strided_slice %238 {offsets = [2, 0], sizes = [2, 256], strides = [1, 1]} : vector<4x256xf32> to vector<2x256xf32>
    %246 = vector.broadcast %240 : vector<1x256xf32> to vector<2x256xf32>
    %247 = arith.mulf %246, %245 : vector<2x256xf32>
    %248 = arith.addf %226, %247 : vector<2x256xf32>
    %c2_i32 = arith.constant 2 : i32
    %249 = tpu.dynamic_rotate %5 by %c2_i32 dim 1 : vector<4x256xf32>, i32 -> vector<4x256xf32>
    %c22 = arith.constant 22 : index
    %c0_50 = arith.constant 0 : index
    %250 = vector.load %arg1[%c22, %c0_50] : memref<98x256xf32, #tpu.memory_space<vmem>>, vector<1x256xf32>
    %c71 = arith.constant 71 : index
    %c0_51 = arith.constant 0 : index
    %251 = vector.load %arg1[%c71, %c0_51] : memref<98x256xf32, #tpu.memory_space<vmem>>, vector<1x256xf32>
    %252 = vector.extract_strided_slice %249 {offsets = [0, 0], sizes = [2, 256], strides = [1, 1]} : vector<4x256xf32> to vector<2x256xf32>
    %253 = vector.broadcast %250 : vector<1x256xf32> to vector<2x256xf32>
    %254 = arith.mulf %253, %252 : vector<2x256xf32>
    %255 = arith.addf %233, %254 : vector<2x256xf32>
    %256 = vector.extract_strided_slice %249 {offsets = [2, 0], sizes = [2, 256], strides = [1, 1]} : vector<4x256xf32> to vector<2x256xf32>
    %257 = vector.broadcast %251 : vector<1x256xf32> to vector<2x256xf32>
    %258 = arith.mulf %257, %256 : vector<2x256xf32>
    %259 = arith.addf %237, %258 : vector<2x256xf32>
    %c1_i32 = arith.constant 1 : i32
    %260 = tpu.dynamic_rotate %5 by %c1_i32 dim 1 : vector<4x256xf32>, i32 -> vector<4x256xf32>
    %c23 = arith.constant 23 : index
    %c0_52 = arith.constant 0 : index
    %261 = vector.load %arg1[%c23, %c0_52] : memref<98x256xf32, #tpu.memory_space<vmem>>, vector<1x256xf32>
    %c72 = arith.constant 72 : index
    %c0_53 = arith.constant 0 : index
    %262 = vector.load %arg1[%c72, %c0_53] : memref<98x256xf32, #tpu.memory_space<vmem>>, vector<1x256xf32>
    %263 = vector.extract_strided_slice %260 {offsets = [0, 0], sizes = [2, 256], strides = [1, 1]} : vector<4x256xf32> to vector<2x256xf32>
    %264 = vector.broadcast %261 : vector<1x256xf32> to vector<2x256xf32>
    %265 = arith.mulf %264, %263 : vector<2x256xf32>
    %266 = arith.addf %244, %265 : vector<2x256xf32>
    %267 = vector.extract_strided_slice %260 {offsets = [2, 0], sizes = [2, 256], strides = [1, 1]} : vector<4x256xf32> to vector<2x256xf32>
    %268 = vector.broadcast %262 : vector<1x256xf32> to vector<2x256xf32>
    %269 = arith.mulf %268, %267 : vector<2x256xf32>
    %270 = arith.addf %248, %269 : vector<2x256xf32>
    %c24 = arith.constant 24 : index
    %c0_54 = arith.constant 0 : index
    %271 = vector.load %arg1[%c24, %c0_54] : memref<98x256xf32, #tpu.memory_space<vmem>>, vector<1x256xf32>
    %c73 = arith.constant 73 : index
    %c0_55 = arith.constant 0 : index
    %272 = vector.load %arg1[%c73, %c0_55] : memref<98x256xf32, #tpu.memory_space<vmem>>, vector<1x256xf32>
    %273 = vector.extract_strided_slice %5 {offsets = [0, 0], sizes = [2, 256], strides = [1, 1]} : vector<4x256xf32> to vector<2x256xf32>
    %274 = vector.broadcast %271 : vector<1x256xf32> to vector<2x256xf32>
    %275 = arith.mulf %274, %273 : vector<2x256xf32>
    %276 = arith.addf %255, %275 : vector<2x256xf32>
    %277 = vector.extract_strided_slice %5 {offsets = [2, 0], sizes = [2, 256], strides = [1, 1]} : vector<4x256xf32> to vector<2x256xf32>
    %278 = vector.broadcast %272 : vector<1x256xf32> to vector<2x256xf32>
    %279 = arith.mulf %278, %277 : vector<2x256xf32>
    %280 = arith.addf %259, %279 : vector<2x256xf32>
    %c255_i32 = arith.constant 255 : i32
    %281 = tpu.dynamic_rotate %5 by %c255_i32 dim 1 : vector<4x256xf32>, i32 -> vector<4x256xf32>
    %c25 = arith.constant 25 : index
    %c0_56 = arith.constant 0 : index
    %282 = vector.load %arg1[%c25, %c0_56] : memref<98x256xf32, #tpu.memory_space<vmem>>, vector<1x256xf32>
    %c74 = arith.constant 74 : index
    %c0_57 = arith.constant 0 : index
    %283 = vector.load %arg1[%c74, %c0_57] : memref<98x256xf32, #tpu.memory_space<vmem>>, vector<1x256xf32>
    %284 = vector.extract_strided_slice %281 {offsets = [0, 0], sizes = [2, 256], strides = [1, 1]} : vector<4x256xf32> to vector<2x256xf32>
    %285 = vector.broadcast %282 : vector<1x256xf32> to vector<2x256xf32>
    %286 = arith.mulf %285, %284 : vector<2x256xf32>
    %287 = arith.addf %266, %286 : vector<2x256xf32>
    %288 = vector.extract_strided_slice %281 {offsets = [2, 0], sizes = [2, 256], strides = [1, 1]} : vector<4x256xf32> to vector<2x256xf32>
    %289 = vector.broadcast %283 : vector<1x256xf32> to vector<2x256xf32>
    %290 = arith.mulf %289, %288 : vector<2x256xf32>
    %291 = arith.addf %270, %290 : vector<2x256xf32>
    %c254_i32 = arith.constant 254 : i32
    %292 = tpu.dynamic_rotate %5 by %c254_i32 dim 1 : vector<4x256xf32>, i32 -> vector<4x256xf32>
    %c26 = arith.constant 26 : index
    %c0_58 = arith.constant 0 : index
    %293 = vector.load %arg1[%c26, %c0_58] : memref<98x256xf32, #tpu.memory_space<vmem>>, vector<1x256xf32>
    %c75 = arith.constant 75 : index
    %c0_59 = arith.constant 0 : index
    %294 = vector.load %arg1[%c75, %c0_59] : memref<98x256xf32, #tpu.memory_space<vmem>>, vector<1x256xf32>
    %295 = vector.extract_strided_slice %292 {offsets = [0, 0], sizes = [2, 256], strides = [1, 1]} : vector<4x256xf32> to vector<2x256xf32>
    %296 = vector.broadcast %293 : vector<1x256xf32> to vector<2x256xf32>
    %297 = arith.mulf %296, %295 : vector<2x256xf32>
    %298 = arith.addf %276, %297 : vector<2x256xf32>
    %299 = vector.extract_strided_slice %292 {offsets = [2, 0], sizes = [2, 256], strides = [1, 1]} : vector<4x256xf32> to vector<2x256xf32>
    %300 = vector.broadcast %294 : vector<1x256xf32> to vector<2x256xf32>
    %301 = arith.mulf %300, %299 : vector<2x256xf32>
    %302 = arith.addf %280, %301 : vector<2x256xf32>
    %c253_i32 = arith.constant 253 : i32
    %303 = tpu.dynamic_rotate %5 by %c253_i32 dim 1 : vector<4x256xf32>, i32 -> vector<4x256xf32>
    %c27 = arith.constant 27 : index
    %c0_60 = arith.constant 0 : index
    %304 = vector.load %arg1[%c27, %c0_60] : memref<98x256xf32, #tpu.memory_space<vmem>>, vector<1x256xf32>
    %c76 = arith.constant 76 : index
    %c0_61 = arith.constant 0 : index
    %305 = vector.load %arg1[%c76, %c0_61] : memref<98x256xf32, #tpu.memory_space<vmem>>, vector<1x256xf32>
    %306 = vector.extract_strided_slice %303 {offsets = [0, 0], sizes = [2, 256], strides = [1, 1]} : vector<4x256xf32> to vector<2x256xf32>
    %307 = vector.broadcast %304 : vector<1x256xf32> to vector<2x256xf32>
    %308 = arith.mulf %307, %306 : vector<2x256xf32>
    %309 = arith.addf %287, %308 : vector<2x256xf32>
    %310 = vector.extract_strided_slice %303 {offsets = [2, 0], sizes = [2, 256], strides = [1, 1]} : vector<4x256xf32> to vector<2x256xf32>
    %311 = vector.broadcast %305 : vector<1x256xf32> to vector<2x256xf32>
    %312 = arith.mulf %311, %310 : vector<2x256xf32>
    %313 = arith.addf %291, %312 : vector<2x256xf32>
    %c243_i32 = arith.constant 243 : i32
    %314 = tpu.dynamic_rotate %5 by %c243_i32 dim 1 : vector<4x256xf32>, i32 -> vector<4x256xf32>
    %c28 = arith.constant 28 : index
    %c0_62 = arith.constant 0 : index
    %315 = vector.load %arg1[%c28, %c0_62] : memref<98x256xf32, #tpu.memory_space<vmem>>, vector<1x256xf32>
    %c77 = arith.constant 77 : index
    %c0_63 = arith.constant 0 : index
    %316 = vector.load %arg1[%c77, %c0_63] : memref<98x256xf32, #tpu.memory_space<vmem>>, vector<1x256xf32>
    %317 = vector.extract_strided_slice %314 {offsets = [0, 0], sizes = [2, 256], strides = [1, 1]} : vector<4x256xf32> to vector<2x256xf32>
    %318 = vector.broadcast %315 : vector<1x256xf32> to vector<2x256xf32>
    %319 = arith.mulf %318, %317 : vector<2x256xf32>
    %320 = arith.addf %298, %319 : vector<2x256xf32>
    %321 = vector.extract_strided_slice %314 {offsets = [2, 0], sizes = [2, 256], strides = [1, 1]} : vector<4x256xf32> to vector<2x256xf32>
    %322 = vector.broadcast %316 : vector<1x256xf32> to vector<2x256xf32>
    %323 = arith.mulf %322, %321 : vector<2x256xf32>
    %324 = arith.addf %302, %323 : vector<2x256xf32>
    %c242_i32 = arith.constant 242 : i32
    %325 = tpu.dynamic_rotate %5 by %c242_i32 dim 1 : vector<4x256xf32>, i32 -> vector<4x256xf32>
    %c29 = arith.constant 29 : index
    %c0_64 = arith.constant 0 : index
    %326 = vector.load %arg1[%c29, %c0_64] : memref<98x256xf32, #tpu.memory_space<vmem>>, vector<1x256xf32>
    %c78 = arith.constant 78 : index
    %c0_65 = arith.constant 0 : index
    %327 = vector.load %arg1[%c78, %c0_65] : memref<98x256xf32, #tpu.memory_space<vmem>>, vector<1x256xf32>
    %328 = vector.extract_strided_slice %325 {offsets = [0, 0], sizes = [2, 256], strides = [1, 1]} : vector<4x256xf32> to vector<2x256xf32>
    %329 = vector.broadcast %326 : vector<1x256xf32> to vector<2x256xf32>
    %330 = arith.mulf %329, %328 : vector<2x256xf32>
    %331 = arith.addf %309, %330 : vector<2x256xf32>
    %332 = vector.extract_strided_slice %325 {offsets = [2, 0], sizes = [2, 256], strides = [1, 1]} : vector<4x256xf32> to vector<2x256xf32>
    %333 = vector.broadcast %327 : vector<1x256xf32> to vector<2x256xf32>
    %334 = arith.mulf %333, %332 : vector<2x256xf32>
    %335 = arith.addf %313, %334 : vector<2x256xf32>
    %c241_i32 = arith.constant 241 : i32
    %336 = tpu.dynamic_rotate %5 by %c241_i32 dim 1 : vector<4x256xf32>, i32 -> vector<4x256xf32>
    %c30 = arith.constant 30 : index
    %c0_66 = arith.constant 0 : index
    %337 = vector.load %arg1[%c30, %c0_66] : memref<98x256xf32, #tpu.memory_space<vmem>>, vector<1x256xf32>
    %c79 = arith.constant 79 : index
    %c0_67 = arith.constant 0 : index
    %338 = vector.load %arg1[%c79, %c0_67] : memref<98x256xf32, #tpu.memory_space<vmem>>, vector<1x256xf32>
    %339 = vector.extract_strided_slice %336 {offsets = [0, 0], sizes = [2, 256], strides = [1, 1]} : vector<4x256xf32> to vector<2x256xf32>
    %340 = vector.broadcast %337 : vector<1x256xf32> to vector<2x256xf32>
    %341 = arith.mulf %340, %339 : vector<2x256xf32>
    %342 = arith.addf %320, %341 : vector<2x256xf32>
    %343 = vector.extract_strided_slice %336 {offsets = [2, 0], sizes = [2, 256], strides = [1, 1]} : vector<4x256xf32> to vector<2x256xf32>
    %344 = vector.broadcast %338 : vector<1x256xf32> to vector<2x256xf32>
    %345 = arith.mulf %344, %343 : vector<2x256xf32>
    %346 = arith.addf %324, %345 : vector<2x256xf32>
    %c240_i32 = arith.constant 240 : i32
    %347 = tpu.dynamic_rotate %5 by %c240_i32 dim 1 : vector<4x256xf32>, i32 -> vector<4x256xf32>
    %c31 = arith.constant 31 : index
    %c0_68 = arith.constant 0 : index
    %348 = vector.load %arg1[%c31, %c0_68] : memref<98x256xf32, #tpu.memory_space<vmem>>, vector<1x256xf32>
    %c80 = arith.constant 80 : index
    %c0_69 = arith.constant 0 : index
    %349 = vector.load %arg1[%c80, %c0_69] : memref<98x256xf32, #tpu.memory_space<vmem>>, vector<1x256xf32>
    %350 = vector.extract_strided_slice %347 {offsets = [0, 0], sizes = [2, 256], strides = [1, 1]} : vector<4x256xf32> to vector<2x256xf32>
    %351 = vector.broadcast %348 : vector<1x256xf32> to vector<2x256xf32>
    %352 = arith.mulf %351, %350 : vector<2x256xf32>
    %353 = arith.addf %331, %352 : vector<2x256xf32>
    %354 = vector.extract_strided_slice %347 {offsets = [2, 0], sizes = [2, 256], strides = [1, 1]} : vector<4x256xf32> to vector<2x256xf32>
    %355 = vector.broadcast %349 : vector<1x256xf32> to vector<2x256xf32>
    %356 = arith.mulf %355, %354 : vector<2x256xf32>
    %357 = arith.addf %335, %356 : vector<2x256xf32>
    %c239_i32 = arith.constant 239 : i32
    %358 = tpu.dynamic_rotate %5 by %c239_i32 dim 1 : vector<4x256xf32>, i32 -> vector<4x256xf32>
    %c32 = arith.constant 32 : index
    %c0_70 = arith.constant 0 : index
    %359 = vector.load %arg1[%c32, %c0_70] : memref<98x256xf32, #tpu.memory_space<vmem>>, vector<1x256xf32>
    %c81 = arith.constant 81 : index
    %c0_71 = arith.constant 0 : index
    %360 = vector.load %arg1[%c81, %c0_71] : memref<98x256xf32, #tpu.memory_space<vmem>>, vector<1x256xf32>
    %361 = vector.extract_strided_slice %358 {offsets = [0, 0], sizes = [2, 256], strides = [1, 1]} : vector<4x256xf32> to vector<2x256xf32>
    %362 = vector.broadcast %359 : vector<1x256xf32> to vector<2x256xf32>
    %363 = arith.mulf %362, %361 : vector<2x256xf32>
    %364 = arith.addf %342, %363 : vector<2x256xf32>
    %365 = vector.extract_strided_slice %358 {offsets = [2, 0], sizes = [2, 256], strides = [1, 1]} : vector<4x256xf32> to vector<2x256xf32>
    %366 = vector.broadcast %360 : vector<1x256xf32> to vector<2x256xf32>
    %367 = arith.mulf %366, %365 : vector<2x256xf32>
    %368 = arith.addf %346, %367 : vector<2x256xf32>
    %c238_i32 = arith.constant 238 : i32
    %369 = tpu.dynamic_rotate %5 by %c238_i32 dim 1 : vector<4x256xf32>, i32 -> vector<4x256xf32>
    %c33 = arith.constant 33 : index
    %c0_72 = arith.constant 0 : index
    %370 = vector.load %arg1[%c33, %c0_72] : memref<98x256xf32, #tpu.memory_space<vmem>>, vector<1x256xf32>
    %c82 = arith.constant 82 : index
    %c0_73 = arith.constant 0 : index
    %371 = vector.load %arg1[%c82, %c0_73] : memref<98x256xf32, #tpu.memory_space<vmem>>, vector<1x256xf32>
    %372 = vector.extract_strided_slice %369 {offsets = [0, 0], sizes = [2, 256], strides = [1, 1]} : vector<4x256xf32> to vector<2x256xf32>
    %373 = vector.broadcast %370 : vector<1x256xf32> to vector<2x256xf32>
    %374 = arith.mulf %373, %372 : vector<2x256xf32>
    %375 = arith.addf %353, %374 : vector<2x256xf32>
    %376 = vector.extract_strided_slice %369 {offsets = [2, 0], sizes = [2, 256], strides = [1, 1]} : vector<4x256xf32> to vector<2x256xf32>
    %377 = vector.broadcast %371 : vector<1x256xf32> to vector<2x256xf32>
    %378 = arith.mulf %377, %376 : vector<2x256xf32>
    %379 = arith.addf %357, %378 : vector<2x256xf32>
    %c237_i32 = arith.constant 237 : i32
    %380 = tpu.dynamic_rotate %5 by %c237_i32 dim 1 : vector<4x256xf32>, i32 -> vector<4x256xf32>
    %c34 = arith.constant 34 : index
    %c0_74 = arith.constant 0 : index
    %381 = vector.load %arg1[%c34, %c0_74] : memref<98x256xf32, #tpu.memory_space<vmem>>, vector<1x256xf32>
    %c83 = arith.constant 83 : index
    %c0_75 = arith.constant 0 : index
    %382 = vector.load %arg1[%c83, %c0_75] : memref<98x256xf32, #tpu.memory_space<vmem>>, vector<1x256xf32>
    %383 = vector.extract_strided_slice %380 {offsets = [0, 0], sizes = [2, 256], strides = [1, 1]} : vector<4x256xf32> to vector<2x256xf32>
    %384 = vector.broadcast %381 : vector<1x256xf32> to vector<2x256xf32>
    %385 = arith.mulf %384, %383 : vector<2x256xf32>
    %386 = arith.addf %364, %385 : vector<2x256xf32>
    %387 = vector.extract_strided_slice %380 {offsets = [2, 0], sizes = [2, 256], strides = [1, 1]} : vector<4x256xf32> to vector<2x256xf32>
    %388 = vector.broadcast %382 : vector<1x256xf32> to vector<2x256xf32>
    %389 = arith.mulf %388, %387 : vector<2x256xf32>
    %390 = arith.addf %368, %389 : vector<2x256xf32>
    %c227_i32 = arith.constant 227 : i32
    %391 = tpu.dynamic_rotate %5 by %c227_i32 dim 1 : vector<4x256xf32>, i32 -> vector<4x256xf32>
    %c35 = arith.constant 35 : index
    %c0_76 = arith.constant 0 : index
    %392 = vector.load %arg1[%c35, %c0_76] : memref<98x256xf32, #tpu.memory_space<vmem>>, vector<1x256xf32>
    %c84 = arith.constant 84 : index
    %c0_77 = arith.constant 0 : index
    %393 = vector.load %arg1[%c84, %c0_77] : memref<98x256xf32, #tpu.memory_space<vmem>>, vector<1x256xf32>
    %394 = vector.extract_strided_slice %391 {offsets = [0, 0], sizes = [2, 256], strides = [1, 1]} : vector<4x256xf32> to vector<2x256xf32>
    %395 = vector.broadcast %392 : vector<1x256xf32> to vector<2x256xf32>
    %396 = arith.mulf %395, %394 : vector<2x256xf32>
    %397 = arith.addf %375, %396 : vector<2x256xf32>
    %398 = vector.extract_strided_slice %391 {offsets = [2, 0], sizes = [2, 256], strides = [1, 1]} : vector<4x256xf32> to vector<2x256xf32>
    %399 = vector.broadcast %393 : vector<1x256xf32> to vector<2x256xf32>
    %400 = arith.mulf %399, %398 : vector<2x256xf32>
    %401 = arith.addf %379, %400 : vector<2x256xf32>
    %c226_i32 = arith.constant 226 : i32
    %402 = tpu.dynamic_rotate %5 by %c226_i32 dim 1 : vector<4x256xf32>, i32 -> vector<4x256xf32>
    %c36 = arith.constant 36 : index
    %c0_78 = arith.constant 0 : index
    %403 = vector.load %arg1[%c36, %c0_78] : memref<98x256xf32, #tpu.memory_space<vmem>>, vector<1x256xf32>
    %c85 = arith.constant 85 : index
    %c0_79 = arith.constant 0 : index
    %404 = vector.load %arg1[%c85, %c0_79] : memref<98x256xf32, #tpu.memory_space<vmem>>, vector<1x256xf32>
    %405 = vector.extract_strided_slice %402 {offsets = [0, 0], sizes = [2, 256], strides = [1, 1]} : vector<4x256xf32> to vector<2x256xf32>
    %406 = vector.broadcast %403 : vector<1x256xf32> to vector<2x256xf32>
    %407 = arith.mulf %406, %405 : vector<2x256xf32>
    %408 = arith.addf %386, %407 : vector<2x256xf32>
    %409 = vector.extract_strided_slice %402 {offsets = [2, 0], sizes = [2, 256], strides = [1, 1]} : vector<4x256xf32> to vector<2x256xf32>
    %410 = vector.broadcast %404 : vector<1x256xf32> to vector<2x256xf32>
    %411 = arith.mulf %410, %409 : vector<2x256xf32>
    %412 = arith.addf %390, %411 : vector<2x256xf32>
    %c225_i32 = arith.constant 225 : i32
    %413 = tpu.dynamic_rotate %5 by %c225_i32 dim 1 : vector<4x256xf32>, i32 -> vector<4x256xf32>
    %c37 = arith.constant 37 : index
    %c0_80 = arith.constant 0 : index
    %414 = vector.load %arg1[%c37, %c0_80] : memref<98x256xf32, #tpu.memory_space<vmem>>, vector<1x256xf32>
    %c86 = arith.constant 86 : index
    %c0_81 = arith.constant 0 : index
    %415 = vector.load %arg1[%c86, %c0_81] : memref<98x256xf32, #tpu.memory_space<vmem>>, vector<1x256xf32>
    %416 = vector.extract_strided_slice %413 {offsets = [0, 0], sizes = [2, 256], strides = [1, 1]} : vector<4x256xf32> to vector<2x256xf32>
    %417 = vector.broadcast %414 : vector<1x256xf32> to vector<2x256xf32>
    %418 = arith.mulf %417, %416 : vector<2x256xf32>
    %419 = arith.addf %397, %418 : vector<2x256xf32>
    %420 = vector.extract_strided_slice %413 {offsets = [2, 0], sizes = [2, 256], strides = [1, 1]} : vector<4x256xf32> to vector<2x256xf32>
    %421 = vector.broadcast %415 : vector<1x256xf32> to vector<2x256xf32>
    %422 = arith.mulf %421, %420 : vector<2x256xf32>
    %423 = arith.addf %401, %422 : vector<2x256xf32>
    %c224_i32 = arith.constant 224 : i32
    %424 = tpu.dynamic_rotate %5 by %c224_i32 dim 1 : vector<4x256xf32>, i32 -> vector<4x256xf32>
    %c38 = arith.constant 38 : index
    %c0_82 = arith.constant 0 : index
    %425 = vector.load %arg1[%c38, %c0_82] : memref<98x256xf32, #tpu.memory_space<vmem>>, vector<1x256xf32>
    %c87 = arith.constant 87 : index
    %c0_83 = arith.constant 0 : index
    %426 = vector.load %arg1[%c87, %c0_83] : memref<98x256xf32, #tpu.memory_space<vmem>>, vector<1x256xf32>
    %427 = vector.extract_strided_slice %424 {offsets = [0, 0], sizes = [2, 256], strides = [1, 1]} : vector<4x256xf32> to vector<2x256xf32>
    %428 = vector.broadcast %425 : vector<1x256xf32> to vector<2x256xf32>
    %429 = arith.mulf %428, %427 : vector<2x256xf32>
    %430 = arith.addf %408, %429 : vector<2x256xf32>
    %431 = vector.extract_strided_slice %424 {offsets = [2, 0], sizes = [2, 256], strides = [1, 1]} : vector<4x256xf32> to vector<2x256xf32>
    %432 = vector.broadcast %426 : vector<1x256xf32> to vector<2x256xf32>
    %433 = arith.mulf %432, %431 : vector<2x256xf32>
    %434 = arith.addf %412, %433 : vector<2x256xf32>
    %c223_i32 = arith.constant 223 : i32
    %435 = tpu.dynamic_rotate %5 by %c223_i32 dim 1 : vector<4x256xf32>, i32 -> vector<4x256xf32>
    %c39 = arith.constant 39 : index
    %c0_84 = arith.constant 0 : index
    %436 = vector.load %arg1[%c39, %c0_84] : memref<98x256xf32, #tpu.memory_space<vmem>>, vector<1x256xf32>
    %c88 = arith.constant 88 : index
    %c0_85 = arith.constant 0 : index
    %437 = vector.load %arg1[%c88, %c0_85] : memref<98x256xf32, #tpu.memory_space<vmem>>, vector<1x256xf32>
    %438 = vector.extract_strided_slice %435 {offsets = [0, 0], sizes = [2, 256], strides = [1, 1]} : vector<4x256xf32> to vector<2x256xf32>
    %439 = vector.broadcast %436 : vector<1x256xf32> to vector<2x256xf32>
    %440 = arith.mulf %439, %438 : vector<2x256xf32>
    %441 = arith.addf %419, %440 : vector<2x256xf32>
    %442 = vector.extract_strided_slice %435 {offsets = [2, 0], sizes = [2, 256], strides = [1, 1]} : vector<4x256xf32> to vector<2x256xf32>
    %443 = vector.broadcast %437 : vector<1x256xf32> to vector<2x256xf32>
    %444 = arith.mulf %443, %442 : vector<2x256xf32>
    %445 = arith.addf %423, %444 : vector<2x256xf32>
    %c222_i32 = arith.constant 222 : i32
    %446 = tpu.dynamic_rotate %5 by %c222_i32 dim 1 : vector<4x256xf32>, i32 -> vector<4x256xf32>
    %c40 = arith.constant 40 : index
    %c0_86 = arith.constant 0 : index
    %447 = vector.load %arg1[%c40, %c0_86] : memref<98x256xf32, #tpu.memory_space<vmem>>, vector<1x256xf32>
    %c89 = arith.constant 89 : index
    %c0_87 = arith.constant 0 : index
    %448 = vector.load %arg1[%c89, %c0_87] : memref<98x256xf32, #tpu.memory_space<vmem>>, vector<1x256xf32>
    %449 = vector.extract_strided_slice %446 {offsets = [0, 0], sizes = [2, 256], strides = [1, 1]} : vector<4x256xf32> to vector<2x256xf32>
    %450 = vector.broadcast %447 : vector<1x256xf32> to vector<2x256xf32>
    %451 = arith.mulf %450, %449 : vector<2x256xf32>
    %452 = arith.addf %430, %451 : vector<2x256xf32>
    %453 = vector.extract_strided_slice %446 {offsets = [2, 0], sizes = [2, 256], strides = [1, 1]} : vector<4x256xf32> to vector<2x256xf32>
    %454 = vector.broadcast %448 : vector<1x256xf32> to vector<2x256xf32>
    %455 = arith.mulf %454, %453 : vector<2x256xf32>
    %456 = arith.addf %434, %455 : vector<2x256xf32>
    %c221_i32 = arith.constant 221 : i32
    %457 = tpu.dynamic_rotate %5 by %c221_i32 dim 1 : vector<4x256xf32>, i32 -> vector<4x256xf32>
    %c41 = arith.constant 41 : index
    %c0_88 = arith.constant 0 : index
    %458 = vector.load %arg1[%c41, %c0_88] : memref<98x256xf32, #tpu.memory_space<vmem>>, vector<1x256xf32>
    %c90 = arith.constant 90 : index
    %c0_89 = arith.constant 0 : index
    %459 = vector.load %arg1[%c90, %c0_89] : memref<98x256xf32, #tpu.memory_space<vmem>>, vector<1x256xf32>
    %460 = vector.extract_strided_slice %457 {offsets = [0, 0], sizes = [2, 256], strides = [1, 1]} : vector<4x256xf32> to vector<2x256xf32>
    %461 = vector.broadcast %458 : vector<1x256xf32> to vector<2x256xf32>
    %462 = arith.mulf %461, %460 : vector<2x256xf32>
    %463 = arith.addf %441, %462 : vector<2x256xf32>
    %464 = vector.extract_strided_slice %457 {offsets = [2, 0], sizes = [2, 256], strides = [1, 1]} : vector<4x256xf32> to vector<2x256xf32>
    %465 = vector.broadcast %459 : vector<1x256xf32> to vector<2x256xf32>
    %466 = arith.mulf %465, %464 : vector<2x256xf32>
    %467 = arith.addf %445, %466 : vector<2x256xf32>
    %c211_i32 = arith.constant 211 : i32
    %468 = tpu.dynamic_rotate %5 by %c211_i32 dim 1 : vector<4x256xf32>, i32 -> vector<4x256xf32>
    %c42 = arith.constant 42 : index
    %c0_90 = arith.constant 0 : index
    %469 = vector.load %arg1[%c42, %c0_90] : memref<98x256xf32, #tpu.memory_space<vmem>>, vector<1x256xf32>
    %c91 = arith.constant 91 : index
    %c0_91 = arith.constant 0 : index
    %470 = vector.load %arg1[%c91, %c0_91] : memref<98x256xf32, #tpu.memory_space<vmem>>, vector<1x256xf32>
    %471 = vector.extract_strided_slice %468 {offsets = [0, 0], sizes = [2, 256], strides = [1, 1]} : vector<4x256xf32> to vector<2x256xf32>
    %472 = vector.broadcast %469 : vector<1x256xf32> to vector<2x256xf32>
    %473 = arith.mulf %472, %471 : vector<2x256xf32>
    %474 = arith.addf %452, %473 : vector<2x256xf32>
    %475 = vector.extract_strided_slice %468 {offsets = [2, 0], sizes = [2, 256], strides = [1, 1]} : vector<4x256xf32> to vector<2x256xf32>
    %476 = vector.broadcast %470 : vector<1x256xf32> to vector<2x256xf32>
    %477 = arith.mulf %476, %475 : vector<2x256xf32>
    %478 = arith.addf %456, %477 : vector<2x256xf32>
    %c210_i32 = arith.constant 210 : i32
    %479 = tpu.dynamic_rotate %5 by %c210_i32 dim 1 : vector<4x256xf32>, i32 -> vector<4x256xf32>
    %c43 = arith.constant 43 : index
    %c0_92 = arith.constant 0 : index
    %480 = vector.load %arg1[%c43, %c0_92] : memref<98x256xf32, #tpu.memory_space<vmem>>, vector<1x256xf32>
    %c92 = arith.constant 92 : index
    %c0_93 = arith.constant 0 : index
    %481 = vector.load %arg1[%c92, %c0_93] : memref<98x256xf32, #tpu.memory_space<vmem>>, vector<1x256xf32>
    %482 = vector.extract_strided_slice %479 {offsets = [0, 0], sizes = [2, 256], strides = [1, 1]} : vector<4x256xf32> to vector<2x256xf32>
    %483 = vector.broadcast %480 : vector<1x256xf32> to vector<2x256xf32>
    %484 = arith.mulf %483, %482 : vector<2x256xf32>
    %485 = arith.addf %463, %484 : vector<2x256xf32>
    %486 = vector.extract_strided_slice %479 {offsets = [2, 0], sizes = [2, 256], strides = [1, 1]} : vector<4x256xf32> to vector<2x256xf32>
    %487 = vector.broadcast %481 : vector<1x256xf32> to vector<2x256xf32>
    %488 = arith.mulf %487, %486 : vector<2x256xf32>
    %489 = arith.addf %467, %488 : vector<2x256xf32>
    %c209_i32 = arith.constant 209 : i32
    %490 = tpu.dynamic_rotate %5 by %c209_i32 dim 1 : vector<4x256xf32>, i32 -> vector<4x256xf32>
    %c44 = arith.constant 44 : index
    %c0_94 = arith.constant 0 : index
    %491 = vector.load %arg1[%c44, %c0_94] : memref<98x256xf32, #tpu.memory_space<vmem>>, vector<1x256xf32>
    %c93 = arith.constant 93 : index
    %c0_95 = arith.constant 0 : index
    %492 = vector.load %arg1[%c93, %c0_95] : memref<98x256xf32, #tpu.memory_space<vmem>>, vector<1x256xf32>
    %493 = vector.extract_strided_slice %490 {offsets = [0, 0], sizes = [2, 256], strides = [1, 1]} : vector<4x256xf32> to vector<2x256xf32>
    %494 = vector.broadcast %491 : vector<1x256xf32> to vector<2x256xf32>
    %495 = arith.mulf %494, %493 : vector<2x256xf32>
    %496 = arith.addf %474, %495 : vector<2x256xf32>
    %497 = vector.extract_strided_slice %490 {offsets = [2, 0], sizes = [2, 256], strides = [1, 1]} : vector<4x256xf32> to vector<2x256xf32>
    %498 = vector.broadcast %492 : vector<1x256xf32> to vector<2x256xf32>
    %499 = arith.mulf %498, %497 : vector<2x256xf32>
    %500 = arith.addf %478, %499 : vector<2x256xf32>
    %c208_i32 = arith.constant 208 : i32
    %501 = tpu.dynamic_rotate %5 by %c208_i32 dim 1 : vector<4x256xf32>, i32 -> vector<4x256xf32>
    %c45 = arith.constant 45 : index
    %c0_96 = arith.constant 0 : index
    %502 = vector.load %arg1[%c45, %c0_96] : memref<98x256xf32, #tpu.memory_space<vmem>>, vector<1x256xf32>
    %c94 = arith.constant 94 : index
    %c0_97 = arith.constant 0 : index
    %503 = vector.load %arg1[%c94, %c0_97] : memref<98x256xf32, #tpu.memory_space<vmem>>, vector<1x256xf32>
    %504 = vector.extract_strided_slice %501 {offsets = [0, 0], sizes = [2, 256], strides = [1, 1]} : vector<4x256xf32> to vector<2x256xf32>
    %505 = vector.broadcast %502 : vector<1x256xf32> to vector<2x256xf32>
    %506 = arith.mulf %505, %504 : vector<2x256xf32>
    %507 = arith.addf %485, %506 : vector<2x256xf32>
    %508 = vector.extract_strided_slice %501 {offsets = [2, 0], sizes = [2, 256], strides = [1, 1]} : vector<4x256xf32> to vector<2x256xf32>
    %509 = vector.broadcast %503 : vector<1x256xf32> to vector<2x256xf32>
    %510 = arith.mulf %509, %508 : vector<2x256xf32>
    %511 = arith.addf %489, %510 : vector<2x256xf32>
    %c207_i32 = arith.constant 207 : i32
    %512 = tpu.dynamic_rotate %5 by %c207_i32 dim 1 : vector<4x256xf32>, i32 -> vector<4x256xf32>
    %c46 = arith.constant 46 : index
    %c0_98 = arith.constant 0 : index
    %513 = vector.load %arg1[%c46, %c0_98] : memref<98x256xf32, #tpu.memory_space<vmem>>, vector<1x256xf32>
    %c95 = arith.constant 95 : index
    %c0_99 = arith.constant 0 : index
    %514 = vector.load %arg1[%c95, %c0_99] : memref<98x256xf32, #tpu.memory_space<vmem>>, vector<1x256xf32>
    %515 = vector.extract_strided_slice %512 {offsets = [0, 0], sizes = [2, 256], strides = [1, 1]} : vector<4x256xf32> to vector<2x256xf32>
    %516 = vector.broadcast %513 : vector<1x256xf32> to vector<2x256xf32>
    %517 = arith.mulf %516, %515 : vector<2x256xf32>
    %518 = arith.addf %496, %517 : vector<2x256xf32>
    %519 = vector.extract_strided_slice %512 {offsets = [2, 0], sizes = [2, 256], strides = [1, 1]} : vector<4x256xf32> to vector<2x256xf32>
    %520 = vector.broadcast %514 : vector<1x256xf32> to vector<2x256xf32>
    %521 = arith.mulf %520, %519 : vector<2x256xf32>
    %522 = arith.addf %500, %521 : vector<2x256xf32>
    %c206_i32 = arith.constant 206 : i32
    %523 = tpu.dynamic_rotate %5 by %c206_i32 dim 1 : vector<4x256xf32>, i32 -> vector<4x256xf32>
    %c47 = arith.constant 47 : index
    %c0_100 = arith.constant 0 : index
    %524 = vector.load %arg1[%c47, %c0_100] : memref<98x256xf32, #tpu.memory_space<vmem>>, vector<1x256xf32>
    %c96 = arith.constant 96 : index
    %c0_101 = arith.constant 0 : index
    %525 = vector.load %arg1[%c96, %c0_101] : memref<98x256xf32, #tpu.memory_space<vmem>>, vector<1x256xf32>
    %526 = vector.extract_strided_slice %523 {offsets = [0, 0], sizes = [2, 256], strides = [1, 1]} : vector<4x256xf32> to vector<2x256xf32>
    %527 = vector.broadcast %524 : vector<1x256xf32> to vector<2x256xf32>
    %528 = arith.mulf %527, %526 : vector<2x256xf32>
    %529 = arith.addf %507, %528 : vector<2x256xf32>
    %530 = vector.extract_strided_slice %523 {offsets = [2, 0], sizes = [2, 256], strides = [1, 1]} : vector<4x256xf32> to vector<2x256xf32>
    %531 = vector.broadcast %525 : vector<1x256xf32> to vector<2x256xf32>
    %532 = arith.mulf %531, %530 : vector<2x256xf32>
    %533 = arith.addf %511, %532 : vector<2x256xf32>
    %c205_i32 = arith.constant 205 : i32
    %534 = tpu.dynamic_rotate %5 by %c205_i32 dim 1 : vector<4x256xf32>, i32 -> vector<4x256xf32>
    %c48 = arith.constant 48 : index
    %c0_102 = arith.constant 0 : index
    %535 = vector.load %arg1[%c48, %c0_102] : memref<98x256xf32, #tpu.memory_space<vmem>>, vector<1x256xf32>
    %c97 = arith.constant 97 : index
    %c0_103 = arith.constant 0 : index
    %536 = vector.load %arg1[%c97, %c0_103] : memref<98x256xf32, #tpu.memory_space<vmem>>, vector<1x256xf32>
    %537 = vector.extract_strided_slice %534 {offsets = [0, 0], sizes = [2, 256], strides = [1, 1]} : vector<4x256xf32> to vector<2x256xf32>
    %538 = vector.broadcast %535 : vector<1x256xf32> to vector<2x256xf32>
    %539 = arith.mulf %538, %537 : vector<2x256xf32>
    %540 = arith.addf %518, %539 : vector<2x256xf32>
    %541 = vector.extract_strided_slice %534 {offsets = [2, 0], sizes = [2, 256], strides = [1, 1]} : vector<4x256xf32> to vector<2x256xf32>
    %542 = vector.broadcast %536 : vector<1x256xf32> to vector<2x256xf32>
    %543 = arith.mulf %542, %541 : vector<2x256xf32>
    %544 = arith.addf %522, %543 : vector<2x256xf32>
    %545 = arith.addf %540, %529 : vector<2x256xf32>
    %546 = arith.addf %544, %533 : vector<2x256xf32>
    %547 = arith.addf %545, %546 : vector<2x256xf32>
    %548 = arith.negf %547 : vector<2x256xf32>
    %549 = math.exp %548 : vector<2x256xf32>
    %cst_104 = arith.constant 1.000000e+00 : f32
    %550 = vector.broadcast %cst_104 : f32 to vector<2x256xf32>
    %551 = arith.addf %550, %549 : vector<2x256xf32>
    %552 = arith.divf %550, %551 : vector<2x256xf32>
    %c0_105 = arith.constant 0 : index
    %c0_106 = arith.constant 0 : index
    %553 = vector.load %arg3[%c0_105, %c0_106] : memref<2x256xf32, #tpu.memory_space<vmem>>, vector<2x256xf32>
    tpu.vector_store %arg3[%c0_105, %c0_106], %552 {strides = array<i32>} : memref<2x256xf32, #tpu.memory_space<vmem>>, vector<2x256xf32>,
    return
  }
  func.func @transform_0(%arg0: i32) -> (i32, i32) {
    %c0_i32 = arith.constant 0 : i32
    %c0_i32_0 = arith.constant 0 : i32
    %c0_i32_1 = arith.constant 0 : i32
    return %c0_i32, %c0_i32_0 : i32, i32
  }
  func.func @transform_1(%arg0: i32) -> (i32, i32, i32) {
    %c0_i32 = arith.constant 0 : i32
    %c0_i32_0 = arith.constant 0 : i32
    %c0_i32_1 = arith.constant 0 : i32
    return %arg0, %c0_i32, %c0_i32_0 : i32, i32, i32
  }
  func.func @transform_2(%arg0: i32) -> (i32, i32) {
    %c0_i32 = arith.constant 0 : i32
    %c0_i32_0 = arith.constant 0 : i32
    return %arg0, %c0_i32 : i32, i32
  }
}

</mosaic_0001>

<llo_original>
// kernel: tpu_custom_call.1
$region0: #{tpu_custom_call.1}
  #allocation0 [shape = 'u32[]', space=smem, size = 0x4, offset = 0x4, fixed_abs, tag = 'smem constant byte address 0x4 - core index']
  #allocation1 [shape = 'u32[72,128]{1,0:T(1,128)}', space=vmem, size = 0x9000, scoped, tag = 'internal scratch']
  %s0 = inlined_call_operand.hbm [shape: f32[98,256], index: 0, kind: input, shape index: {}]
  %s1 = inlined_call_operand.hbm [shape: f32[2,32,256], index: 1, kind: input, shape index: {}]
  %s2 = inlined_call_operand.hbm [shape: f32[2,256], index: 2, kind: output, shape index: {}]
  %s3 = sld [smem:[#allocation0]]
  $region26: #{tpu_custom_call.1} parent=0
    _
  %s5 = ssub.s32 1, %s3
  %s6 = scalar_select 0, %s5, %s3
  $region1: #{tpu_custom_call.1} parent=0
    #allocation2 [shape = 'u8[106496]{0}', space=vmem, size = 0x1a000, scoped, tag = 'input window, operand 0, single buffered']
    #allocation3 [shape = 's32[1]{0}', space=sflag, size = 0x4, scoped, tag = 'scoped memory for tpu_custom_call.1']
    #allocation4 [shape = 's32[1]{0}', space=sflag, size = 0x4, scoped, tag = 'scoped memory for tpu_custom_call.1']
    #allocation5 [shape = 'u8[65536]{0}', space=vmem, size = 0x10000, scoped, tag = 'input window, operand 1, single buffered']
    #allocation6 [shape = 's32[1]{0}', space=sflag, size = 0x4, scoped, tag = 'scoped memory for tpu_custom_call.1']
    #allocation7 [shape = 'u8[2048]{0}', space=vmem, size = 0x800, scoped, tag = 'output window, operand 0, single buffered']
    %7 = vsyncpa [#allocation3], 0
    %8 = vsyncpa [#allocation6], 0
    %9 = vsyncpa [#allocation4], 0
    // Predicated region
    $region2: #{tpu_custom_call.1} parent=1 // pred_check
      _
    $region3: #{tpu_custom_call.1} parent=1 // pred_check_branch
      %11 = sbr.rel (0) target = $region5
    $region4: #{tpu_custom_call.1} parent=1 // pred_region
      %13 = vsyncadd [#allocation3], 0
      %s14 = sshll.u32 %s0, 4
      %s15 = int_to_ptr.hbm [resolvable:$true] %s14
      %s16 = sshll.u32 [#allocation2], 4
      %s17 = int_to_ptr.vmem [resolvable:$true] %s16
      %22 = dma.hbm_to_vmem [thread:$0]  %s15, 3328, %s17, [#allocation3], 256, 256, 16
    $region5: #{tpu_custom_call.1} parent=1 // pred_fallthru
      _
    // Predicated region
    $region6: #{tpu_custom_call.1} parent=1 // pred_check
      _
    $region7: #{tpu_custom_call.1} parent=1 // pred_check_branch
      %24 = sbr.rel (0) target = $region9
    $region8: #{tpu_custom_call.1} parent=1 // pred_region
      %26 = vsyncadd [#allocation6], 0
      %s27 = sshll.u32 %s1, 4
      %s28 = int_to_ptr.hbm [resolvable:$true] %s27
      %s29 = sshll.u32 [#allocation5], 4
      %s30 = int_to_ptr.vmem [resolvable:$true] %s29
      %35 = dma.hbm_to_vmem [thread:$0]  %s28, 2048, %s30, [#allocation6], 256, 256, 16
    $region9: #{tpu_custom_call.1} parent=1 // pred_fallthru
      _
    // Predicated region
    $region10: #{tpu_custom_call.1} parent=1 // pred_check
      _
    $region11: #{tpu_custom_call.1} parent=1 // pred_check_branch
      %37 = sbr.rel (0) target = $region13
    $region12: #{tpu_custom_call.1} parent=1 // pred_region
      %39 = dma.done [#allocation3], 3328
    $region13: #{tpu_custom_call.1} parent=1 // pred_fallthru
      _
    // Predicated region
    $region14: #{tpu_custom_call.1} parent=1 // pred_check
      _
    $region15: #{tpu_custom_call.1} parent=1 // pred_check_branch
      %41 = sbr.rel (0) target = $region17
    $region16: #{tpu_custom_call.1} parent=1 // pred_region
      %43 = dma.done [#allocation6], 2048
    $region17: #{tpu_custom_call.1} parent=1 // pred_fallthru
      _
    %v44 = vld [vmem:[#allocation5] sm:$0xff]
    %v45 = vld [vmem:[#allocation5 + $0x8] sm:$0xff]
    %v46 = vld [vmem:[#allocation5 + $0x10] sm:$0xff]
    %v47 = vld [vmem:[#allocation5 + $0x18] sm:$0xff]
    %v48 = vld [vmem:[#allocation5 + $0x20] sm:$0xff]
    %v49 = vld [vmem:[#allocation5 + $0x28] sm:$0xff]
    %v50 = vld [vmem:[#allocation5 + $0x30] sm:$0xff]
    %v51 = vld [vmem:[#allocation5 + $0x38] sm:$0xff]
    %v52 = vld [vmem:[#allocation5 + $0x40] sm:$0xff]
    %v53 = vld [vmem:[#allocation5 + $0x48] sm:$0xff]
    %v54 = vld [vmem:[#allocation5 + $0x50] sm:$0xff]
    %v55 = vld [vmem:[#allocation5 + $0x58] sm:$0xff]
    %v56 = vld [vmem:[#allocation5 + $0x60] sm:$0xff]
    %v57 = vld [vmem:[#allocation5 + $0x68] sm:$0xff]
    %v58 = vld [vmem:[#allocation5 + $0x70] sm:$0xff]
    %v59 = vld [vmem:[#allocation5 + $0x78] sm:$0xff]
    %v60 = vadd.f32 %v44, %v46
    %v61 = vadd.f32 %v60, %v48
    %v62 = vadd.f32 %v61, %v50
    %v63 = vrot.slane %v62, 4
    %v64 = vadd.f32 %v62, %v63
    %v65 = vrot.slane %v64, 2
    %v66 = vadd.f32 %v64, %v65
    %v67 = vrot.slane %v66, 1
    %v68 = vadd.f32 %v66, %v67
    %v69 = vadd.f32 %v45, %v47
    %v70 = vadd.f32 %v69, %v49
    %v71 = vadd.f32 %v70, %v51
    %v72 = vrot.slane %v71, 4
    %v73 = vadd.f32 %v71, %v72
    %v74 = vrot.slane %v73, 2
    %v75 = vadd.f32 %v73, %v74
    %v76 = vrot.slane %v75, 1
    %v77 = vadd.f32 %v75, %v76
    %v78 = vadd.f32 %v52, %v54
    %v79 = vadd.f32 %v78, %v56
    %v80 = vadd.f32 %v79, %v58
    %v81 = vrot.slane %v80, 4
    %v82 = vadd.f32 %v80, %v81
    %v83 = vrot.slane %v82, 2
    %v84 = vadd.f32 %v82, %v83
    %v85 = vrot.slane %v84, 1
    %v86 = vadd.f32 %v84, %v85
    %v87 = vadd.f32 %v53, %v55
    %v88 = vadd.f32 %v87, %v57
    %v89 = vadd.f32 %v88, %v59
    %v90 = vrot.slane %v89, 4
    %v91 = vadd.f32 %v89, %v90
    %v92 = vrot.slane %v91, 2
    %v93 = vadd.f32 %v91, %v92
    %v94 = vrot.slane %v93, 1
    %v95 = vadd.f32 %v93, %v94
    %v96 = vmul.f32 %v68, 0.03125
    %v97 = vmul.f32 %v77, 0.03125
    %v98 = vmul.f32 %v86, 0.03125
    %v99 = vmul.f32 %v95, 0.03125
    %v100 = vmax.f32 %v44, %v46
    %v101 = vmax.f32 %v100, %v48
    %v102 = vmax.f32 %v101, %v50
    %v103 = vrot.slane %v102, 4
    %v104 = vmax.f32 %v102, %v103
    %v105 = vrot.slane %v104, 2
    %v106 = vmax.f32 %v104, %v105
    %v107 = vrot.slane %v106, 1
    %v108 = vmax.f32 %v106, %v107
    %v109 = vmax.f32 %v45, %v47
    %v110 = vmax.f32 %v109, %v49
    %v111 = vmax.f32 %v110, %v51
    %v112 = vrot.slane %v111, 4
    %v113 = vmax.f32 %v111, %v112
    %v114 = vrot.slane %v113, 2
    %v115 = vmax.f32 %v113, %v114
    %v116 = vrot.slane %v115, 1
    %v117 = vmax.f32 %v115, %v116
    %v118 = vmax.f32 %v52, %v54
    %v119 = vmax.f32 %v118, %v56
    %v120 = vmax.f32 %v119, %v58
    %v121 = vrot.slane %v120, 4
    %v122 = vmax.f32 %v120, %v121
    %v123 = vrot.slane %v122, 2
    %v124 = vmax.f32 %v122, %v123
    %v125 = vrot.slane %v124, 1
    %v126 = vmax.f32 %v124, %v125
    %v127 = vmax.f32 %v53, %v55
    %v128 = vmax.f32 %v127, %v57
    %v129 = vmax.f32 %v128, %v59
    %v130 = vrot.slane %v129, 4
    %v131 = vmax.f32 %v129, %v130
    %v132 = vrot.slane %v131, 2
    %v133 = vmax.f32 %v131, %v132
    %v134 = vrot.slane %v133, 1
    %v135 = vmax.f32 %v133, %v134
    %vm140 = vcmask 1041409
    %v141 = vsel %vm140, %v98, %v96
    %v142 = vsel %vm140, %v99, %v97
    %vm149 = vcmask 1043459
    %v150 = vsel %vm149, %v126, %v108
    %v151 = vsel %vm149, %v135, %v117
    %vm154 = vcmask 1041408
    %v155 = vsel %vm154, %v141, %v150
    %v156 = vsel %vm154, %v142, %v151
    %157 = vrot.lane.b32.xlu0 %v155, 51
    %v158 = vpop.permute.xlu0 %157
    %159 = vrot.lane.b32.xlu0 %v156, 51
    %v160 = vpop.permute.xlu0 %159
    %v161 = vlaneseq
    %v162 = vand.u32 %v161, 127
    %vm163 = vcmp.lt.s32.totalorder %v162, 51
    %v164 = vsel %vm163, %v158, %v160
    %v165 = vsel %vm163, %v160, %v158
    %v166 = vld [vmem:[#allocation2] ss:$8 sm:$0x3]
    %s167 = scalar_lea.vmem [#allocation2], 97
    %v168 = vld [vmem:[%s167] ss:$8 sm:$0x3]
    %v170 = vperm.slane %v166, 0
    %v171 = vperm.slane %v166, 1
    %v174 = vmul.f32 %v170, %v165
    %v175 = vmul.f32 %v171, %v164
    %v176 = vadd.f32 %v174, 0.0
    %v177 = vadd.f32 %v175, 0.0
    %v179 = vperm.slane %v168, 0
    %v180 = vperm.slane %v168, 1
    %v183 = vmul.f32 %v179, %v165
    %v184 = vmul.f32 %v180, %v164
    %v185 = vadd.f32 %v183, 0.0
    %v186 = vadd.f32 %v184, 0.0
    %187 = vrot.lane.b32.xlu0 %v155, 50
    %v188 = vpop.permute.xlu0 %187
    %189 = vrot.lane.b32.xlu0 %v156, 50
    %v190 = vpop.permute.xlu0 %189
    %vm191 = vcmp.lt.s32.totalorder %v162, 50
    %v192 = vsel %vm191, %v188, %v190
    %v193 = vsel %vm191, %v190, %v188
    %s194 = scalar_lea.vmem [#allocation2], 1
    %v195 = vld [vmem:[%s194] ss:$8 sm:$0x3]
    %s196 = scalar_lea.vmem [#allocation2], 98
    %v197 = vld [vmem:[%s196] ss:$8 sm:$0x3]
    %v199 = vperm.slane %v195, 0
    %v200 = vperm.slane %v195, 1
    %v203 = vmul.f32 %v199, %v193
    %v204 = vmul.f32 %v200, %v192
    %v205 = vadd.f32 %v203, 0.0
    %v206 = vadd.f32 %v204, 0.0
    %v208 = vperm.slane %v197, 0
    %v209 = vperm.slane %v197, 1
    %v212 = vmul.f32 %v208, %v193
    %v213 = vmul.f32 %v209, %v192
    %v214 = vadd.f32 %v212, 0.0
    %v215 = vadd.f32 %v213, 0.0
    %216 = vrot.lane.b32.xlu0 %v155, 49
    %v217 = vpop.permute.xlu0 %216
    %218 = vrot.lane.b32.xlu0 %v156, 49
    %v219 = vpop.permute.xlu0 %218
    %vm220 = vcmp.lt.s32.totalorder %v162, 49
    %v221 = vsel %vm220, %v217, %v219
    %v222 = vsel %vm220, %v219, %v217
    %s223 = scalar_lea.vmem [#allocation2], 2
    %v224 = vld [vmem:[%s223] ss:$8 sm:$0x3]
    %s225 = scalar_lea.vmem [#allocation2], 99
    %v226 = vld [vmem:[%s225] ss:$8 sm:$0x3]
    %v228 = vperm.slane %v224, 0
    %v229 = vperm.slane %v224, 1
    %v232 = vmul.f32 %v228, %v222
    %v233 = vmul.f32 %v229, %v221
    %v234 = vadd.f32 %v176, %v232
    %v235 = vadd.f32 %v177, %v233
    %v237 = vperm.slane %v226, 0
    %v238 = vperm.slane %v226, 1
    %v241 = vmul.f32 %v237, %v222
    %v242 = vmul.f32 %v238, %v221
    %v243 = vadd.f32 %v185, %v241
    %v244 = vadd.f32 %v186, %v242
    %245 = vrot.lane.b32.xlu0 %v155, 48
    %v246 = vpop.permute.xlu0 %245
    %247 = vrot.lane.b32.xlu0 %v156, 48
    %v248 = vpop.permute.xlu0 %247
    %vm249 = vcmp.lt.s32.totalorder %v162, 48
    %v250 = vsel %vm249, %v246, %v248
    %v251 = vsel %vm249, %v248, %v246
    %s252 = scalar_lea.vmem [#allocation2], 3
    %v253 = vld [vmem:[%s252] ss:$8 sm:$0x3]
    %s254 = scalar_lea.vmem [#allocation2], 100
    %v255 = vld [vmem:[%s254] ss:$8 sm:$0x3]
    %v257 = vperm.slane %v253, 0
    %v258 = vperm.slane %v253, 1
    %v261 = vmul.f32 %v257, %v251
    %v262 = vmul.f32 %v258, %v250
    %v263 = vadd.f32 %v205, %v261
    %v264 = vadd.f32 %v206, %v262
    %v266 = vperm.slane %v255, 0
    %v267 = vperm.slane %v255, 1
    %v270 = vmul.f32 %v266, %v251
    %v271 = vmul.f32 %v267, %v250
    %v272 = vadd.f32 %v214, %v270
    %v273 = vadd.f32 %v215, %v271
    %274 = vrot.lane.b32.xlu0 %v155, 47
    %v275 = vpop.permute.xlu0 %274
    %276 = vrot.lane.b32.xlu0 %v156, 47
    %v277 = vpop.permute.xlu0 %276
    %vm278 = vcmp.lt.s32.totalorder %v162, 47
    %v279 = vsel %vm278, %v275, %v277
    %v280 = vsel %vm278, %v277, %v275
    %s281 = scalar_lea.vmem [#allocation2], 4
    %v282 = vld [vmem:[%s281] ss:$8 sm:$0x3]
    %s283 = scalar_lea.vmem [#allocation2], 101
    %v284 = vld [vmem:[%s283] ss:$8 sm:$0x3]
    %v286 = vperm.slane %v282, 0
    %v287 = vperm.slane %v282, 1
    %v290 = vmul.f32 %v286, %v280
    %v291 = vmul.f32 %v287, %v279
    %v292 = vadd.f32 %v234, %v290
    %v293 = vadd.f32 %v235, %v291
    %v295 = vperm.slane %v284, 0
    %v296 = vperm.slane %v284, 1
    %v299 = vmul.f32 %v295, %v280
    %v300 = vmul.f32 %v296, %v279
    %v301 = vadd.f32 %v243, %v299
    %v302 = vadd.f32 %v244, %v300
    %303 = vrot.lane.b32.xlu0 %v155, 46
    %v304 = vpop.permute.xlu0 %303
    %305 = vrot.lane.b32.xlu0 %v156, 46
    %v306 = vpop.permute.xlu0 %305
    %vm307 = vcmp.lt.s32.totalorder %v162, 46
    %v308 = vsel %vm307, %v304, %v306
    %v309 = vsel %vm307, %v306, %v304
    %s310 = scalar_lea.vmem [#allocation2], 5
    %v311 = vld [vmem:[%s310] ss:$8 sm:$0x3]
    %s312 = scalar_lea.vmem [#allocation2], 102
    %v313 = vld [vmem:[%s312] ss:$8 sm:$0x3]
    %v315 = vperm.slane %v311, 0
    %v316 = vperm.slane %v311, 1
    %v319 = vmul.f32 %v315, %v309
    %v320 = vmul.f32 %v316, %v308
    %v321 = vadd.f32 %v263, %v319
    %v322 = vadd.f32 %v264, %v320
    %v324 = vperm.slane %v313, 0
    %v325 = vperm.slane %v313, 1
    %v328 = vmul.f32 %v324, %v309
    %v329 = vmul.f32 %v325, %v308
    %v330 = vadd.f32 %v272, %v328
    %v331 = vadd.f32 %v273, %v329
    %332 = vrot.lane.b32.xlu0 %v155, 45
    %v333 = vpop.permute.xlu0 %332
    %334 = vrot.lane.b32.xlu0 %v156, 45
    %v335 = vpop.permute.xlu0 %334
    %vm336 = vcmp.lt.s32.totalorder %v162, 45
    %v337 = vsel %vm336, %v333, %v335
    %v338 = vsel %vm336, %v335, %v333
    %s339 = scalar_lea.vmem [#allocation2], 6
    %v340 = vld [vmem:[%s339] ss:$8 sm:$0x3]
    %s341 = scalar_lea.vmem [#allocation2], 103
    %v342 = vld [vmem:[%s341] ss:$8 sm:$0x3]
    %v344 = vperm.slane %v340, 0
    %v345 = vperm.slane %v340, 1
    %v348 = vmul.f32 %v344, %v338
    %v349 = vmul.f32 %v345, %v337
    %v350 = vadd.f32 %v292, %v348
    %v351 = vadd.f32 %v293, %v349
    %v353 = vperm.slane %v342, 0
    %v354 = vperm.slane %v342, 1
    %v357 = vmul.f32 %v353, %v338
    %v358 = vmul.f32 %v354, %v337
    %v359 = vadd.f32 %v301, %v357
    %v360 = vadd.f32 %v302, %v358
    %361 = vrot.lane.b32.xlu0 %v155, 35
    %v362 = vpop.permute.xlu0 %361
    %363 = vrot.lane.b32.xlu0 %v156, 35
    %v364 = vpop.permute.xlu0 %363
    %vm365 = vcmp.lt.s32.totalorder %v162, 35
    %v366 = vsel %vm365, %v362, %v364
    %v367 = vsel %vm365, %v364, %v362
    %s368 = scalar_lea.vmem [#allocation2], 7
    %v369 = vld [vmem:[%s368] ss:$8 sm:$0x3]
    %s370 = scalar_lea.vmem [#allocation2], 112
    %v371 = vld [vmem:[%s370] ss:$8 sm:$0x3]
    %v373 = vperm.slane %v369, 0
    %v374 = vperm.slane %v369, 1
    %v377 = vmul.f32 %v373, %v367
    %v378 = vmul.f32 %v374, %v366
    %v379 = vadd.f32 %v321, %v377
    %v380 = vadd.f32 %v322, %v378
    %v382 = vperm.slane %v371, 0
    %v383 = vperm.slane %v371, 1
    %v386 = vmul.f32 %v382, %v367
    %v387 = vmul.f32 %v383, %v366
    %v388 = vadd.f32 %v330, %v386
    %v389 = vadd.f32 %v331, %v387
    %390 = vrot.lane.b32.xlu0 %v155, 34
    %v391 = vpop.permute.xlu0 %390
    %392 = vrot.lane.b32.xlu0 %v156, 34
    %v393 = vpop.permute.xlu0 %392
    %vm394 = vcmp.lt.s32.totalorder %v162, 34
    %v395 = vsel %vm394, %v391, %v393
    %v396 = vsel %vm394, %v393, %v391
    %s397 = scalar_lea.vmem [#allocation2], 16
    %v398 = vld [vmem:[%s397] ss:$8 sm:$0x3]
    %s399 = scalar_lea.vmem [#allocation2], 113
    %v400 = vld [vmem:[%s399] ss:$8 sm:$0x3]
    %v402 = vperm.slane %v398, 0
    %v403 = vperm.slane %v398, 1
    %v406 = vmul.f32 %v402, %v396
    %v407 = vmul.f32 %v403, %v395
    %v408 = vadd.f32 %v350, %v406
    %v409 = vadd.f32 %v351, %v407
    %v411 = vperm.slane %v400, 0
    %v412 = vperm.slane %v400, 1
    %v415 = vmul.f32 %v411, %v396
    %v416 = vmul.f32 %v412, %v395
    %v417 = vadd.f32 %v359, %v415
    %v418 = vadd.f32 %v360, %v416
    %419 = vrot.lane.b32.xlu0 %v155, 33
    %v420 = vpop.permute.xlu0 %419
    %421 = vrot.lane.b32.xlu0 %v156, 33
    %v422 = vpop.permute.xlu0 %421
    %vm423 = vcmp.lt.s32.totalorder %v162, 33
    %v424 = vsel %vm423, %v420, %v422
    %v425 = vsel %vm423, %v422, %v420
    %s426 = scalar_lea.vmem [#allocation2], 17
    %v427 = vld [vmem:[%s426] ss:$8 sm:$0x3]
    %s428 = scalar_lea.vmem [#allocation2], 114
    %v429 = vld [vmem:[%s428] ss:$8 sm:$0x3]
    %v431 = vperm.slane %v427, 0
    %v432 = vperm.slane %v427, 1
    %v435 = vmul.f32 %v431, %v425
    %v436 = vmul.f32 %v432, %v424
    %v437 = vadd.f32 %v379, %v435
    %v438 = vadd.f32 %v380, %v436
    %v440 = vperm.slane %v429, 0
    %v441 = vperm.slane %v429, 1
    %v444 = vmul.f32 %v440, %v425
    %v445 = vmul.f32 %v441, %v424
    %v446 = vadd.f32 %v388, %v444
    %v447 = vadd.f32 %v389, %v445
    %448 = vrot.lane.b32.xlu0 %v155, 32
    %v449 = vpop.permute.xlu0 %448
    %450 = vrot.lane.b32.xlu0 %v156, 32
    %v451 = vpop.permute.xlu0 %450
    %vm452 = vcmp.lt.s32.totalorder %v162, 32
    %v453 = vsel %vm452, %v449, %v451
    %v454 = vsel %vm452, %v451, %v449
    %s455 = scalar_lea.vmem [#allocation2], 18
    %v456 = vld [vmem:[%s455] ss:$8 sm:$0x3]
    %s457 = scalar_lea.vmem [#allocation2], 115
    %v458 = vld [vmem:[%s457] ss:$8 sm:$0x3]
    %v460 = vperm.slane %v456, 0
    %v461 = vperm.slane %v456, 1
    %v464 = vmul.f32 %v460, %v454
    %v465 = vmul.f32 %v461, %v453
    %v466 = vadd.f32 %v408, %v464
    %v467 = vadd.f32 %v409, %v465
    %v469 = vperm.slane %v458, 0
    %v470 = vperm.slane %v458, 1
    %v473 = vmul.f32 %v469, %v454
    %v474 = vmul.f32 %v470, %v453
    %v475 = vadd.f32 %v417, %v473
    %v476 = vadd.f32 %v418, %v474
    %477 = vrot.lane.b32.xlu0 %v155, 31
    %v478 = vpop.permute.xlu0 %477
    %479 = vrot.lane.b32.xlu0 %v156, 31
    %v480 = vpop.permute.xlu0 %479
    %vm481 = vcmp.lt.s32.totalorder %v162, 31
    %v482 = vsel %vm481, %v478, %v480
    %v483 = vsel %vm481, %v480, %v478
    %s484 = scalar_lea.vmem [#allocation2], 19
    %v485 = vld [vmem:[%s484] ss:$8 sm:$0x3]
    %s486 = scalar_lea.vmem [#allocation2], 116
    %v487 = vld [vmem:[%s486] ss:$8 sm:$0x3]
    %v489 = vperm.slane %v485, 0
    %v490 = vperm.slane %v485, 1
    %v493 = vmul.f32 %v489, %v483
    %v494 = vmul.f32 %v490, %v482
    %v495 = vadd.f32 %v437, %v493
    %v496 = vadd.f32 %v438, %v494
    %v498 = vperm.slane %v487, 0
    %v499 = vperm.slane %v487, 1
    %v502 = vmul.f32 %v498, %v483
    %v503 = vmul.f32 %v499, %v482
    %v504 = vadd.f32 %v446, %v502
    %v505 = vadd.f32 %v447, %v503
    %506 = vrot.lane.b32.xlu0 %v155, 30
    %v507 = vpop.permute.xlu0 %506
    %508 = vrot.lane.b32.xlu0 %v156, 30
    %v509 = vpop.permute.xlu0 %508
    %vm510 = vcmp.lt.s32.totalorder %v162, 30
    %v511 = vsel %vm510, %v507, %v509
    %v512 = vsel %vm510, %v509, %v507
    %s513 = scalar_lea.vmem [#allocation2], 20
    %v514 = vld [vmem:[%s513] ss:$8 sm:$0x3]
    %s515 = scalar_lea.vmem [#allocation2], 117
    %v516 = vld [vmem:[%s515] ss:$8 sm:$0x3]
    %v518 = vperm.slane %v514, 0
    %v519 = vperm.slane %v514, 1
    %v522 = vmul.f32 %v518, %v512
    %v523 = vmul.f32 %v519, %v511
    %v524 = vadd.f32 %v466, %v522
    %v525 = vadd.f32 %v467, %v523
    %v527 = vperm.slane %v516, 0
    %v528 = vperm.slane %v516, 1
    %v531 = vmul.f32 %v527, %v512
    %v532 = vmul.f32 %v528, %v511
    %v533 = vadd.f32 %v475, %v531
    %v534 = vadd.f32 %v476, %v532
    %535 = vrot.lane.b32.xlu0 %v155, 29
    %v536 = vpop.permute.xlu0 %535
    %537 = vrot.lane.b32.xlu0 %v156, 29
    %v538 = vpop.permute.xlu0 %537
    %vm539 = vcmp.lt.s32.totalorder %v162, 29
    %v540 = vsel %vm539, %v536, %v538
    %v541 = vsel %vm539, %v538, %v536
    %s542 = scalar_lea.vmem [#allocation2], 21
    %v543 = vld [vmem:[%s542] ss:$8 sm:$0x3]
    %s544 = scalar_lea.vmem [#allocation2], 118
    %v545 = vld [vmem:[%s544] ss:$8 sm:$0x3]
    %v547 = vperm.slane %v543, 0
    %v548 = vperm.slane %v543, 1
    %v551 = vmul.f32 %v547, %v541
    %v552 = vmul.f32 %v548, %v540
    %v553 = vadd.f32 %v495, %v551
    %v554 = vadd.f32 %v496, %v552
    %v556 = vperm.slane %v545, 0
    %v557 = vperm.slane %v545, 1
    %v560 = vmul.f32 %v556, %v541
    %v561 = vmul.f32 %v557, %v540
    %v562 = vadd.f32 %v504, %v560
    %v563 = vadd.f32 %v505, %v561
    %564 = vrot.lane.b32.xlu0 %v155, 19
    %v565 = vpop.permute.xlu0 %564
    %566 = vrot.lane.b32.xlu0 %v156, 19
    %v567 = vpop.permute.xlu0 %566
    %vm568 = vcmp.lt.s32.totalorder %v162, 19
    %v569 = vsel %vm568, %v565, %v567
    %v570 = vsel %vm568, %v567, %v565
    %s571 = scalar_lea.vmem [#allocation2], 22
    %v572 = vld [vmem:[%s571] ss:$8 sm:$0x3]
    %s573 = scalar_lea.vmem [#allocation2], 119
    %v574 = vld [vmem:[%s573] ss:$8 sm:$0x3]
    %v576 = vperm.slane %v572, 0
    %v577 = vperm.slane %v572, 1
    %v580 = vmul.f32 %v576, %v570
    %v581 = vmul.f32 %v577, %v569
    %v582 = vadd.f32 %v524, %v580
    %v583 = vadd.f32 %v525, %v581
    %v585 = vperm.slane %v574, 0
    %v586 = vperm.slane %v574, 1
    %v589 = vmul.f32 %v585, %v570
    %v590 = vmul.f32 %v586, %v569
    %v591 = vadd.f32 %v533, %v589
    %v592 = vadd.f32 %v534, %v590
    %593 = vrot.lane.b32.xlu0 %v155, 18
    %v594 = vpop.permute.xlu0 %593
    %595 = vrot.lane.b32.xlu0 %v156, 18
    %v596 = vpop.permute.xlu0 %595
    %vm597 = vcmp.lt.s32.totalorder %v162, 18
    %v598 = vsel %vm597, %v594, %v596
    %v599 = vsel %vm597, %v596, %v594
    %s600 = scalar_lea.vmem [#allocation2], 23
    %v601 = vld [vmem:[%s600] ss:$8 sm:$0x3]
    %s602 = scalar_lea.vmem [#allocation2], 128
    %v603 = vld [vmem:[%s602] ss:$8 sm:$0x3]
    %v605 = vperm.slane %v601, 0
    %v606 = vperm.slane %v601, 1
    %v609 = vmul.f32 %v605, %v599
    %v610 = vmul.f32 %v606, %v598
    %v611 = vadd.f32 %v553, %v609
    %v612 = vadd.f32 %v554, %v610
    %v614 = vperm.slane %v603, 0
    %v615 = vperm.slane %v603, 1
    %v618 = vmul.f32 %v614, %v599
    %v619 = vmul.f32 %v615, %v598
    %v620 = vadd.f32 %v562, %v618
    %v621 = vadd.f32 %v563, %v619
    %622 = vrot.lane.b32.xlu0 %v155, 17
    %v623 = vpop.permute.xlu0 %622
    %624 = vrot.lane.b32.xlu0 %v156, 17
    %v625 = vpop.permute.xlu0 %624
    %vm626 = vcmp.lt.s32.totalorder %v162, 17
    %v627 = vsel %vm626, %v623, %v625
    %v628 = vsel %vm626, %v625, %v623
    %s629 = scalar_lea.vmem [#allocation2], 32
    %v630 = vld [vmem:[%s629] ss:$8 sm:$0x3]
    %s631 = scalar_lea.vmem [#allocation2], 129
    %v632 = vld [vmem:[%s631] ss:$8 sm:$0x3]
    %v634 = vperm.slane %v630, 0
    %v635 = vperm.slane %v630, 1
    %v638 = vmul.f32 %v634, %v628
    %v639 = vmul.f32 %v635, %v627
    %v640 = vadd.f32 %v582, %v638
    %v641 = vadd.f32 %v583, %v639
    %v643 = vperm.slane %v632, 0
    %v644 = vperm.slane %v632, 1
    %v647 = vmul.f32 %v643, %v628
    %v648 = vmul.f32 %v644, %v627
    %v649 = vadd.f32 %v591, %v647
    %v650 = vadd.f32 %v592, %v648
    %651 = vrot.lane.b32.xlu0 %v155, 16
    %v652 = vpop.permute.xlu0 %651
    %653 = vrot.lane.b32.xlu0 %v156, 16
    %v654 = vpop.permute.xlu0 %653
    %vm655 = vcmp.lt.s32.totalorder %v162, 16
    %v656 = vsel %vm655, %v652, %v654
    %v657 = vsel %vm655, %v654, %v652
    %s658 = scalar_lea.vmem [#allocation2], 33
    %v659 = vld [vmem:[%s658] ss:$8 sm:$0x3]
    %s660 = scalar_lea.vmem [#allocation2], 130
    %v661 = vld [vmem:[%s660] ss:$8 sm:$0x3]
    %v663 = vperm.slane %v659, 0
    %v664 = vperm.slane %v659, 1
    %v667 = vmul.f32 %v663, %v657
    %v668 = vmul.f32 %v664, %v656
    %v669 = vadd.f32 %v611, %v667
    %v670 = vadd.f32 %v612, %v668
    %v672 = vperm.slane %v661, 0
    %v673 = vperm.slane %v661, 1
    %v676 = vmul.f32 %v672, %v657
    %v677 = vmul.f32 %v673, %v656
    %v678 = vadd.f32 %v620, %v676
    %v679 = vadd.f32 %v621, %v677
    %680 = vrot.lane.b32.xlu0 %v155, 15
    %v681 = vpop.permute.xlu0 %680
    %682 = vrot.lane.b32.xlu0 %v156, 15
    %v683 = vpop.permute.xlu0 %682
    %vm684 = vcmp.lt.s32.totalorder %v162, 15
    %v685 = vsel %vm684, %v681, %v683
    %v686 = vsel %vm684, %v683, %v681
    %s687 = scalar_lea.vmem [#allocation2], 34
    %v688 = vld [vmem:[%s687] ss:$8 sm:$0x3]
    %s689 = scalar_lea.vmem [#allocation2], 131
    %v690 = vld [vmem:[%s689] ss:$8 sm:$0x3]
    %v692 = vperm.slane %v688, 0
    %v693 = vperm.slane %v688, 1
    %v696 = vmul.f32 %v692, %v686
    %v697 = vmul.f32 %v693, %v685
    %v698 = vadd.f32 %v640, %v696
    %v699 = vadd.f32 %v641, %v697
    %v701 = vperm.slane %v690, 0
    %v702 = vperm.slane %v690, 1
    %v705 = vmul.f32 %v701, %v686
    %v706 = vmul.f32 %v702, %v685
    %v707 = vadd.f32 %v649, %v705
    %v708 = vadd.f32 %v650, %v706
    %709 = vrot.lane.b32.xlu0 %v155, 14
    %v710 = vpop.permute.xlu0 %709
    %711 = vrot.lane.b32.xlu0 %v156, 14
    %v712 = vpop.permute.xlu0 %711
    %vm713 = vcmp.lt.s32.totalorder %v162, 14
    %v714 = vsel %vm713, %v710, %v712
    %v715 = vsel %vm713, %v712, %v710
    %s716 = scalar_lea.vmem [#allocation2], 35
    %v717 = vld [vmem:[%s716] ss:$8 sm:$0x3]
    %s718 = scalar_lea.vmem [#allocation2], 132
    %v719 = vld [vmem:[%s718] ss:$8 sm:$0x3]
    %v721 = vperm.slane %v717, 0
    %v722 = vperm.slane %v717, 1
    %v725 = vmul.f32 %v721, %v715
    %v726 = vmul.f32 %v722, %v714
    %v727 = vadd.f32 %v669, %v725
    %v728 = vadd.f32 %v670, %v726
    %v730 = vperm.slane %v719, 0
    %v731 = vperm.slane %v719, 1
    %v734 = vmul.f32 %v730, %v715
    %v735 = vmul.f32 %v731, %v714
    %v736 = vadd.f32 %v678, %v734
    %v737 = vadd.f32 %v679, %v735
    %738 = vrot.lane.b32.xlu0 %v155, 13
    %v739 = vpop.permute.xlu0 %738
    %740 = vrot.lane.b32.xlu0 %v156, 13
    %v741 = vpop.permute.xlu0 %740
    %vm742 = vcmp.lt.s32.totalorder %v162, 13
    %v743 = vsel %vm742, %v739, %v741
    %v744 = vsel %vm742, %v741, %v739
    %s745 = scalar_lea.vmem [#allocation2], 36
    %v746 = vld [vmem:[%s745] ss:$8 sm:$0x3]
    %s747 = scalar_lea.vmem [#allocation2], 133
    %v748 = vld [vmem:[%s747] ss:$8 sm:$0x3]
    %v750 = vperm.slane %v746, 0
    %v751 = vperm.slane %v746, 1
    %v754 = vmul.f32 %v750, %v744
    %v755 = vmul.f32 %v751, %v743
    %v756 = vadd.f32 %v698, %v754
    %v757 = vadd.f32 %v699, %v755
    %v759 = vperm.slane %v748, 0
    %v760 = vperm.slane %v748, 1
    %v763 = vmul.f32 %v759, %v744
    %v764 = vmul.f32 %v760, %v743
    %v765 = vadd.f32 %v707, %v763
    %v766 = vadd.f32 %v708, %v764
    %767 = vrot.lane.b32.xlu0 %v155, 3
    %v768 = vpop.permute.xlu0 %767
    %769 = vrot.lane.b32.xlu0 %v156, 3
    %v770 = vpop.permute.xlu0 %769
    %vm771 = vcmp.lt.s32.totalorder %v162, 3
    %v772 = vsel %vm771, %v768, %v770
    %v773 = vsel %vm771, %v770, %v768
    %s774 = scalar_lea.vmem [#allocation2], 37
    %v775 = vld [vmem:[%s774] ss:$8 sm:$0x3]
    %s776 = scalar_lea.vmem [#allocation2], 134
    %v777 = vld [vmem:[%s776] ss:$8 sm:$0x3]
    %v779 = vperm.slane %v775, 0
    %v780 = vperm.slane %v775, 1
    %v783 = vmul.f32 %v779, %v773
    %v784 = vmul.f32 %v780, %v772
    %v785 = vadd.f32 %v727, %v783
    %v786 = vadd.f32 %v728, %v784
    %v788 = vperm.slane %v777, 0
    %v789 = vperm.slane %v777, 1
    %v792 = vmul.f32 %v788, %v773
    %v793 = vmul.f32 %v789, %v772
    %v794 = vadd.f32 %v736, %v792
    %v795 = vadd.f32 %v737, %v793
    %796 = vrot.lane.b32.xlu0 %v155, 2
    %v797 = vpop.permute.xlu0 %796
    %798 = vrot.lane.b32.xlu0 %v156, 2
    %v799 = vpop.permute.xlu0 %798
    %vm800 = vcmp.lt.s32.totalorder %v162, 2
    %v801 = vsel %vm800, %v797, %v799
    %v802 = vsel %vm800, %v799, %v797
    %s803 = scalar_lea.vmem [#allocation2], 38
    %v804 = vld [vmem:[%s803] ss:$8 sm:$0x3]
    %s805 = scalar_lea.vmem [#allocation2], 135
    %v806 = vld [vmem:[%s805] ss:$8 sm:$0x3]
    %v808 = vperm.slane %v804, 0
    %v809 = vperm.slane %v804, 1
    %v812 = vmul.f32 %v808, %v802
    %v813 = vmul.f32 %v809, %v801
    %v814 = vadd.f32 %v756, %v812
    %v815 = vadd.f32 %v757, %v813
    %v817 = vperm.slane %v806, 0
    %v818 = vperm.slane %v806, 1
    %v821 = vmul.f32 %v817, %v802
    %v822 = vmul.f32 %v818, %v801
    %v823 = vadd.f32 %v765, %v821
    %v824 = vadd.f32 %v766, %v822
    %825 = vrot.lane.b32.xlu0 %v155, 1
    %v826 = vpop.permute.xlu0 %825
    %827 = vrot.lane.b32.xlu0 %v156, 1
    %v828 = vpop.permute.xlu0 %827
    %vm829 = vcmp.lt.s32.totalorder %v162, 1
    %v830 = vsel %vm829, %v826, %v828
    %v831 = vsel %vm829, %v828, %v826
    %s832 = scalar_lea.vmem [#allocation2], 39
    %v833 = vld [vmem:[%s832] ss:$8 sm:$0x3]
    %s834 = scalar_lea.vmem [#allocation2], 144
    %v835 = vld [vmem:[%s834] ss:$8 sm:$0x3]
    %v837 = vperm.slane %v833, 0
    %v838 = vperm.slane %v833, 1
    %v841 = vmul.f32 %v837, %v831
    %v842 = vmul.f32 %v838, %v830
    %v843 = vadd.f32 %v785, %v841
    %v844 = vadd.f32 %v786, %v842
    %v846 = vperm.slane %v835, 0
    %v847 = vperm.slane %v835, 1
    %v850 = vmul.f32 %v846, %v831
    %v851 = vmul.f32 %v847, %v830
    %v852 = vadd.f32 %v794, %v850
    %v853 = vadd.f32 %v795, %v851
    %s854 = scalar_lea.vmem [#allocation2], 48
    %v855 = vld [vmem:[%s854] ss:$8 sm:$0x3]
    %s856 = scalar_lea.vmem [#allocation2], 145
    %v857 = vld [vmem:[%s856] ss:$8 sm:$0x3]
    %v859 = vperm.slane %v855, 0
    %v860 = vperm.slane %v855, 1
    %v863 = vmul.f32 %v859, %v155
    %v864 = vmul.f32 %v860, %v156
    %v865 = vadd.f32 %v814, %v863
    %v866 = vadd.f32 %v815, %v864
    %v868 = vperm.slane %v857, 0
    %v869 = vperm.slane %v857, 1
    %v872 = vmul.f32 %v868, %v155
    %v873 = vmul.f32 %v869, %v156
    %v874 = vadd.f32 %v823, %v872
    %v875 = vadd.f32 %v824, %v873
    %876 = vrot.lane.b32.xlu0 %v155, 127
    %v877 = vpop.permute.xlu0 %876
    %878 = vrot.lane.b32.xlu0 %v156, 127
    %v879 = vpop.permute.xlu0 %878
    %vm880 = vcmp.lt.s32.totalorder %v162, 127
    %v881 = vsel %vm880, %v877, %v879
    %v882 = vsel %vm880, %v879, %v877
    %s883 = scalar_lea.vmem [#allocation2], 49
    %v884 = vld [vmem:[%s883] ss:$8 sm:$0x3]
    %s885 = scalar_lea.vmem [#allocation2], 146
    %v886 = vld [vmem:[%s885] ss:$8 sm:$0x3]
    %v888 = vperm.slane %v884, 0
    %v889 = vperm.slane %v884, 1
    %v892 = vmul.f32 %v888, %v881
    %v893 = vmul.f32 %v889, %v882
    %v894 = vadd.f32 %v843, %v892
    %v895 = vadd.f32 %v844, %v893
    %v897 = vperm.slane %v886, 0
    %v898 = vperm.slane %v886, 1
    %v901 = vmul.f32 %v897, %v881
    %v902 = vmul.f32 %v898, %v882
    %v903 = vadd.f32 %v852, %v901
    %v904 = vadd.f32 %v853, %v902
    %905 = vrot.lane.b32.xlu0 %v155, 126
    %v906 = vpop.permute.xlu0 %905
    %907 = vrot.lane.b32.xlu0 %v156, 126
    %v908 = vpop.permute.xlu0 %907
    %vm909 = vcmp.lt.s32.totalorder %v162, 126
    %v910 = vsel %vm909, %v906, %v908
    %v911 = vsel %vm909, %v908, %v906
    %s912 = scalar_lea.vmem [#allocation2], 50
    %v913 = vld [vmem:[%s912] ss:$8 sm:$0x3]
    %s914 = scalar_lea.vmem [#allocation2], 147
    %v915 = vld [vmem:[%s914] ss:$8 sm:$0x3]
    %v917 = vperm.slane %v913, 0
    %v918 = vperm.slane %v913, 1
    %v921 = vmul.f32 %v917, %v910
    %v922 = vmul.f32 %v918, %v911
    %v923 = vadd.f32 %v865, %v921
    %v924 = vadd.f32 %v866, %v922
    %v926 = vperm.slane %v915, 0
    %v927 = vperm.slane %v915, 1
    %v930 = vmul.f32 %v926, %v910
    %v931 = vmul.f32 %v927, %v911
    %v932 = vadd.f32 %v874, %v930
    %v933 = vadd.f32 %v875, %v931
    %934 = vrot.lane.b32.xlu0 %v155, 125
    %v935 = vpop.permute.xlu0 %934
    %936 = vrot.lane.b32.xlu0 %v156, 125
    %v937 = vpop.permute.xlu0 %936
    %vm938 = vcmp.lt.s32.totalorder %v162, 125
    %v939 = vsel %vm938, %v935, %v937
    %v940 = vsel %vm938, %v937, %v935
    %s941 = scalar_lea.vmem [#allocation2], 51
    %v942 = vld [vmem:[%s941] ss:$8 sm:$0x3]
    %s943 = scalar_lea.vmem [#allocation2], 148
    %v944 = vld [vmem:[%s943] ss:$8 sm:$0x3]
    %v946 = vperm.slane %v942, 0
    %v947 = vperm.slane %v942, 1
    %v950 = vmul.f32 %v946, %v939
    %v951 = vmul.f32 %v947, %v940
    %v952 = vadd.f32 %v894, %v950
    %v953 = vadd.f32 %v895, %v951
    %v955 = vperm.slane %v944, 0
    %v956 = vperm.slane %v944, 1
    %v959 = vmul.f32 %v955, %v939
    %v960 = vmul.f32 %v956, %v940
    %v961 = vadd.f32 %v903, %v959
    %v962 = vadd.f32 %v904, %v960
    %963 = vrot.lane.b32.xlu0 %v155, 115
    %v964 = vpop.permute.xlu0 %963
    %965 = vrot.lane.b32.xlu0 %v156, 115
    %v966 = vpop.permute.xlu0 %965
    %vm967 = vcmp.lt.s32.totalorder %v162, 115
    %v968 = vsel %vm967, %v964, %v966
    %v969 = vsel %vm967, %v966, %v964
    %s970 = scalar_lea.vmem [#allocation2], 52
    %v971 = vld [vmem:[%s970] ss:$8 sm:$0x3]
    %s972 = scalar_lea.vmem [#allocation2], 149
    %v973 = vld [vmem:[%s972] ss:$8 sm:$0x3]
    %v975 = vperm.slane %v971, 0
    %v976 = vperm.slane %v971, 1
    %v979 = vmul.f32 %v975, %v968
    %v980 = vmul.f32 %v976, %v969
    %v981 = vadd.f32 %v923, %v979
    %v982 = vadd.f32 %v924, %v980
    %v984 = vperm.slane %v973, 0
    %v985 = vperm.slane %v973, 1
    %v988 = vmul.f32 %v984, %v968
    %v989 = vmul.f32 %v985, %v969
    %v990 = vadd.f32 %v932, %v988
    %v991 = vadd.f32 %v933, %v989
    %992 = vrot.lane.b32.xlu0 %v155, 114
    %v993 = vpop.permute.xlu0 %992
    %994 = vrot.lane.b32.xlu0 %v156, 114
    %v995 = vpop.permute.xlu0 %994
    %vm996 = vcmp.lt.s32.totalorder %v162, 114
    %v997 = vsel %vm996, %v993, %v995
    %v998 = vsel %vm996, %v995, %v993
    %s999 = scalar_lea.vmem [#allocation2], 53
    %v1000 = vld [vmem:[%s999] ss:$8 sm:$0x3]
    %s1001 = scalar_lea.vmem [#allocation2], 150
    %v1002 = vld [vmem:[%s1001] ss:$8 sm:$0x3]
    %v1004 = vperm.slane %v1000, 0
    %v1005 = vperm.slane %v1000, 1
    %v1008 = vmul.f32 %v1004, %v997
    %v1009 = vmul.f32 %v1005, %v998
    %v1010 = vadd.f32 %v952, %v1008
    %v1011 = vadd.f32 %v953, %v1009
    %v1013 = vperm.slane %v1002, 0
    %v1014 = vperm.slane %v1002, 1
    %v1017 = vmul.f32 %v1013, %v997
    %v1018 = vmul.f32 %v1014, %v998
    %v1019 = vadd.f32 %v961, %v1017
    %v1020 = vadd.f32 %v962, %v1018
    %1021 = vrot.lane.b32.xlu0 %v155, 113
    %v1022 = vpop.permute.xlu0 %1021
    %1023 = vrot.lane.b32.xlu0 %v156, 113
    %v1024 = vpop.permute.xlu0 %1023
    %vm1025 = vcmp.lt.s32.totalorder %v162, 113
    %v1026 = vsel %vm1025, %v1022, %v1024
    %v1027 = vsel %vm1025, %v1024, %v1022
    %s1028 = scalar_lea.vmem [#allocation2], 54
    %v1029 = vld [vmem:[%s1028] ss:$8 sm:$0x3]
    %s1030 = scalar_lea.vmem [#allocation2], 151
    %v1031 = vld [vmem:[%s1030] ss:$8 sm:$0x3]
    %v1033 = vperm.slane %v1029, 0
    %v1034 = vperm.slane %v1029, 1
    %v1037 = vmul.f32 %v1033, %v1026
    %v1038 = vmul.f32 %v1034, %v1027
    %v1039 = vadd.f32 %v981, %v1037
    %v1040 = vadd.f32 %v982, %v1038
    %v1042 = vperm.slane %v1031, 0
    %v1043 = vperm.slane %v1031, 1
    %v1046 = vmul.f32 %v1042, %v1026
    %v1047 = vmul.f32 %v1043, %v1027
    %v1048 = vadd.f32 %v990, %v1046
    %v1049 = vadd.f32 %v991, %v1047
    %1050 = vrot.lane.b32.xlu0 %v155, 112
    %v1051 = vpop.permute.xlu0 %1050
    %1052 = vrot.lane.b32.xlu0 %v156, 112
    %v1053 = vpop.permute.xlu0 %1052
    %vm1054 = vcmp.lt.s32.totalorder %v162, 112
    %v1055 = vsel %vm1054, %v1051, %v1053
    %v1056 = vsel %vm1054, %v1053, %v1051
    %s1057 = scalar_lea.vmem [#allocation2], 55
    %v1058 = vld [vmem:[%s1057] ss:$8 sm:$0x3]
    %s1059 = scalar_lea.vmem [#allocation2], 160
    %v1060 = vld [vmem:[%s1059] ss:$8 sm:$0x3]
    %v1062 = vperm.slane %v1058, 0
    %v1063 = vperm.slane %v1058, 1
    %v1066 = vmul.f32 %v1062, %v1055
    %v1067 = vmul.f32 %v1063, %v1056
    %v1068 = vadd.f32 %v1010, %v1066
    %v1069 = vadd.f32 %v1011, %v1067
    %v1071 = vperm.slane %v1060, 0
    %v1072 = vperm.slane %v1060, 1
    %v1075 = vmul.f32 %v1071, %v1055
    %v1076 = vmul.f32 %v1072, %v1056
    %v1077 = vadd.f32 %v1019, %v1075
    %v1078 = vadd.f32 %v1020, %v1076
    %1079 = vrot.lane.b32.xlu0 %v155, 111
    %v1080 = vpop.permute.xlu0 %1079
    %1081 = vrot.lane.b32.xlu0 %v156, 111
    %v1082 = vpop.permute.xlu0 %1081
    %vm1083 = vcmp.lt.s32.totalorder %v162, 111
    %v1084 = vsel %vm1083, %v1080, %v1082
    %v1085 = vsel %vm1083, %v1082, %v1080
    %s1086 = scalar_lea.vmem [#allocation2], 64
    %v1087 = vld [vmem:[%s1086] ss:$8 sm:$0x3]
    %s1088 = scalar_lea.vmem [#allocation2], 161
    %v1089 = vld [vmem:[%s1088] ss:$8 sm:$0x3]
    %v1091 = vperm.slane %v1087, 0
    %v1092 = vperm.slane %v1087, 1
    %v1095 = vmul.f32 %v1091, %v1084
    %v1096 = vmul.f32 %v1092, %v1085
    %v1097 = vadd.f32 %v1039, %v1095
    %v1098 = vadd.f32 %v1040, %v1096
    %v1100 = vperm.slane %v1089, 0
    %v1101 = vperm.slane %v1089, 1
    %v1104 = vmul.f32 %v1100, %v1084
    %v1105 = vmul.f32 %v1101, %v1085
    %v1106 = vadd.f32 %v1048, %v1104
    %v1107 = vadd.f32 %v1049, %v1105
    %1108 = vrot.lane.b32.xlu0 %v155, 110
    %v1109 = vpop.permute.xlu0 %1108
    %1110 = vrot.lane.b32.xlu0 %v156, 110
    %v1111 = vpop.permute.xlu0 %1110
    %vm1112 = vcmp.lt.s32.totalorder %v162, 110
    %v1113 = vsel %vm1112, %v1109, %v1111
    %v1114 = vsel %vm1112, %v1111, %v1109
    %s1115 = scalar_lea.vmem [#allocation2], 65
    %v1116 = vld [vmem:[%s1115] ss:$8 sm:$0x3]
    %s1117 = scalar_lea.vmem [#allocation2], 162
    %v1118 = vld [vmem:[%s1117] ss:$8 sm:$0x3]
    %v1120 = vperm.slane %v1116, 0
    %v1121 = vperm.slane %v1116, 1
    %v1124 = vmul.f32 %v1120, %v1113
    %v1125 = vmul.f32 %v1121, %v1114
    %v1126 = vadd.f32 %v1068, %v1124
    %v1127 = vadd.f32 %v1069, %v1125
    %v1129 = vperm.slane %v1118, 0
    %v1130 = vperm.slane %v1118, 1
    %v1133 = vmul.f32 %v1129, %v1113
    %v1134 = vmul.f32 %v1130, %v1114
    %v1135 = vadd.f32 %v1077, %v1133
    %v1136 = vadd.f32 %v1078, %v1134
    %1137 = vrot.lane.b32.xlu0 %v155, 109
    %v1138 = vpop.permute.xlu0 %1137
    %1139 = vrot.lane.b32.xlu0 %v156, 109
    %v1140 = vpop.permute.xlu0 %1139
    %vm1141 = vcmp.lt.s32.totalorder %v162, 109
    %v1142 = vsel %vm1141, %v1138, %v1140
    %v1143 = vsel %vm1141, %v1140, %v1138
    %s1144 = scalar_lea.vmem [#allocation2], 66
    %v1145 = vld [vmem:[%s1144] ss:$8 sm:$0x3]
    %s1146 = scalar_lea.vmem [#allocation2], 163
    %v1147 = vld [vmem:[%s1146] ss:$8 sm:$0x3]
    %v1149 = vperm.slane %v1145, 0
    %v1150 = vperm.slane %v1145, 1
    %v1153 = vmul.f32 %v1149, %v1142
    %v1154 = vmul.f32 %v1150, %v1143
    %v1155 = vadd.f32 %v1097, %v1153
    %v1156 = vadd.f32 %v1098, %v1154
    %v1158 = vperm.slane %v1147, 0
    %v1159 = vperm.slane %v1147, 1
    %v1162 = vmul.f32 %v1158, %v1142
    %v1163 = vmul.f32 %v1159, %v1143
    %v1164 = vadd.f32 %v1106, %v1162
    %v1165 = vadd.f32 %v1107, %v1163
    %1166 = vrot.lane.b32.xlu0 %v155, 99
    %v1167 = vpop.permute.xlu0 %1166
    %1168 = vrot.lane.b32.xlu0 %v156, 99
    %v1169 = vpop.permute.xlu0 %1168
    %vm1170 = vcmp.lt.s32.totalorder %v162, 99
    %v1171 = vsel %vm1170, %v1167, %v1169
    %v1172 = vsel %vm1170, %v1169, %v1167
    %s1173 = scalar_lea.vmem [#allocation2], 67
    %v1174 = vld [vmem:[%s1173] ss:$8 sm:$0x3]
    %s1175 = scalar_lea.vmem [#allocation2], 164
    %v1176 = vld [vmem:[%s1175] ss:$8 sm:$0x3]
    %v1178 = vperm.slane %v1174, 0
    %v1179 = vperm.slane %v1174, 1
    %v1182 = vmul.f32 %v1178, %v1171
    %v1183 = vmul.f32 %v1179, %v1172
    %v1184 = vadd.f32 %v1126, %v1182
    %v1185 = vadd.f32 %v1127, %v1183
    %v1187 = vperm.slane %v1176, 0
    %v1188 = vperm.slane %v1176, 1
    %v1191 = vmul.f32 %v1187, %v1171
    %v1192 = vmul.f32 %v1188, %v1172
    %v1193 = vadd.f32 %v1135, %v1191
    %v1194 = vadd.f32 %v1136, %v1192
    %1195 = vrot.lane.b32.xlu0 %v155, 98
    %v1196 = vpop.permute.xlu0 %1195
    %1197 = vrot.lane.b32.xlu0 %v156, 98
    %v1198 = vpop.permute.xlu0 %1197
    %vm1199 = vcmp.lt.s32.totalorder %v162, 98
    %v1200 = vsel %vm1199, %v1196, %v1198
    %v1201 = vsel %vm1199, %v1198, %v1196
    %s1202 = scalar_lea.vmem [#allocation2], 68
    %v1203 = vld [vmem:[%s1202] ss:$8 sm:$0x3]
    %s1204 = scalar_lea.vmem [#allocation2], 165
    %v1205 = vld [vmem:[%s1204] ss:$8 sm:$0x3]
    %v1207 = vperm.slane %v1203, 0
    %v1208 = vperm.slane %v1203, 1
    %v1211 = vmul.f32 %v1207, %v1200
    %v1212 = vmul.f32 %v1208, %v1201
    %v1213 = vadd.f32 %v1155, %v1211
    %v1214 = vadd.f32 %v1156, %v1212
    %v1216 = vperm.slane %v1205, 0
    %v1217 = vperm.slane %v1205, 1
    %v1220 = vmul.f32 %v1216, %v1200
    %v1221 = vmul.f32 %v1217, %v1201
    %v1222 = vadd.f32 %v1164, %v1220
    %v1223 = vadd.f32 %v1165, %v1221
    %1224 = vrot.lane.b32.xlu0 %v155, 97
    %v1225 = vpop.permute.xlu0 %1224
    %1226 = vrot.lane.b32.xlu0 %v156, 97
    %v1227 = vpop.permute.xlu0 %1226
    %vm1228 = vcmp.lt.s32.totalorder %v162, 97
    %v1229 = vsel %vm1228, %v1225, %v1227
    %v1230 = vsel %vm1228, %v1227, %v1225
    %s1231 = scalar_lea.vmem [#allocation2], 69
    %v1232 = vld [vmem:[%s1231] ss:$8 sm:$0x3]
    %s1233 = scalar_lea.vmem [#allocation2], 166
    %v1234 = vld [vmem:[%s1233] ss:$8 sm:$0x3]
    %v1236 = vperm.slane %v1232, 0
    %v1237 = vperm.slane %v1232, 1
    %v1240 = vmul.f32 %v1236, %v1229
    %v1241 = vmul.f32 %v1237, %v1230
    %v1242 = vadd.f32 %v1184, %v1240
    %v1243 = vadd.f32 %v1185, %v1241
    %v1245 = vperm.slane %v1234, 0
    %v1246 = vperm.slane %v1234, 1
    %v1249 = vmul.f32 %v1245, %v1229
    %v1250 = vmul.f32 %v1246, %v1230
    %v1251 = vadd.f32 %v1193, %v1249
    %v1252 = vadd.f32 %v1194, %v1250
    %1253 = vrot.lane.b32.xlu0 %v155, 96
    %v1254 = vpop.permute.xlu0 %1253
    %1255 = vrot.lane.b32.xlu0 %v156, 96
    %v1256 = vpop.permute.xlu0 %1255
    %vm1257 = vcmp.lt.s32.totalorder %v162, 96
    %v1258 = vsel %vm1257, %v1254, %v1256
    %v1259 = vsel %vm1257, %v1256, %v1254
    %s1260 = scalar_lea.vmem [#allocation2], 70
    %v1261 = vld [vmem:[%s1260] ss:$8 sm:$0x3]
    %s1262 = scalar_lea.vmem [#allocation2], 167
    %v1263 = vld [vmem:[%s1262] ss:$8 sm:$0x3]
    %v1265 = vperm.slane %v1261, 0
    %v1266 = vperm.slane %v1261, 1
    %v1269 = vmul.f32 %v1265, %v1258
    %v1270 = vmul.f32 %v1266, %v1259
    %v1271 = vadd.f32 %v1213, %v1269
    %v1272 = vadd.f32 %v1214, %v1270
    %v1274 = vperm.slane %v1263, 0
    %v1275 = vperm.slane %v1263, 1
    %v1278 = vmul.f32 %v1274, %v1258
    %v1279 = vmul.f32 %v1275, %v1259
    %v1280 = vadd.f32 %v1222, %v1278
    %v1281 = vadd.f32 %v1223, %v1279
    %1282 = vrot.lane.b32.xlu0 %v155, 95
    %v1283 = vpop.permute.xlu0 %1282
    %1284 = vrot.lane.b32.xlu0 %v156, 95
    %v1285 = vpop.permute.xlu0 %1284
    %vm1286 = vcmp.lt.s32.totalorder %v162, 95
    %v1287 = vsel %vm1286, %v1283, %v1285
    %v1288 = vsel %vm1286, %v1285, %v1283
    %s1289 = scalar_lea.vmem [#allocation2], 71
    %v1290 = vld [vmem:[%s1289] ss:$8 sm:$0x3]
    %s1291 = scalar_lea.vmem [#allocation2], 176
    %v1292 = vld [vmem:[%s1291] ss:$8 sm:$0x3]
    %v1294 = vperm.slane %v1290, 0
    %v1295 = vperm.slane %v1290, 1
    %v1298 = vmul.f32 %v1294, %v1287
    %v1299 = vmul.f32 %v1295, %v1288
    %v1300 = vadd.f32 %v1242, %v1298
    %v1301 = vadd.f32 %v1243, %v1299
    %v1303 = vperm.slane %v1292, 0
    %v1304 = vperm.slane %v1292, 1
    %v1307 = vmul.f32 %v1303, %v1287
    %v1308 = vmul.f32 %v1304, %v1288
    %v1309 = vadd.f32 %v1251, %v1307
    %v1310 = vadd.f32 %v1252, %v1308
    %1311 = vrot.lane.b32.xlu0 %v155, 94
    %v1312 = vpop.permute.xlu0 %1311
    %1313 = vrot.lane.b32.xlu0 %v156, 94
    %v1314 = vpop.permute.xlu0 %1313
    %vm1315 = vcmp.lt.s32.totalorder %v162, 94
    %v1316 = vsel %vm1315, %v1312, %v1314
    %v1317 = vsel %vm1315, %v1314, %v1312
    %s1318 = scalar_lea.vmem [#allocation2], 80
    %v1319 = vld [vmem:[%s1318] ss:$8 sm:$0x3]
    %s1320 = scalar_lea.vmem [#allocation2], 177
    %v1321 = vld [vmem:[%s1320] ss:$8 sm:$0x3]
    %v1323 = vperm.slane %v1319, 0
    %v1324 = vperm.slane %v1319, 1
    %v1327 = vmul.f32 %v1323, %v1316
    %v1328 = vmul.f32 %v1324, %v1317
    %v1329 = vadd.f32 %v1271, %v1327
    %v1330 = vadd.f32 %v1272, %v1328
    %v1332 = vperm.slane %v1321, 0
    %v1333 = vperm.slane %v1321, 1
    %v1336 = vmul.f32 %v1332, %v1316
    %v1337 = vmul.f32 %v1333, %v1317
    %v1338 = vadd.f32 %v1280, %v1336
    %v1339 = vadd.f32 %v1281, %v1337
    %1340 = vrot.lane.b32.xlu0 %v155, 93
    %v1341 = vpop.permute.xlu0 %1340
    %1342 = vrot.lane.b32.xlu0 %v156, 93
    %v1343 = vpop.permute.xlu0 %1342
    %vm1344 = vcmp.lt.s32.totalorder %v162, 93
    %v1345 = vsel %vm1344, %v1341, %v1343
    %v1346 = vsel %vm1344, %v1343, %v1341
    %s1347 = scalar_lea.vmem [#allocation2], 81
    %v1348 = vld [vmem:[%s1347] ss:$8 sm:$0x3]
    %s1349 = scalar_lea.vmem [#allocation2], 178
    %v1350 = vld [vmem:[%s1349] ss:$8 sm:$0x3]
    %v1352 = vperm.slane %v1348, 0
    %v1353 = vperm.slane %v1348, 1
    %v1356 = vmul.f32 %v1352, %v1345
    %v1357 = vmul.f32 %v1353, %v1346
    %v1358 = vadd.f32 %v1300, %v1356
    %v1359 = vadd.f32 %v1301, %v1357
    %v1361 = vperm.slane %v1350, 0
    %v1362 = vperm.slane %v1350, 1
    %v1365 = vmul.f32 %v1361, %v1345
    %v1366 = vmul.f32 %v1362, %v1346
    %v1367 = vadd.f32 %v1309, %v1365
    %v1368 = vadd.f32 %v1310, %v1366
    %1369 = vrot.lane.b32.xlu0 %v155, 83
    %v1370 = vpop.permute.xlu0 %1369
    %1371 = vrot.lane.b32.xlu0 %v156, 83
    %v1372 = vpop.permute.xlu0 %1371
    %vm1373 = vcmp.lt.s32.totalorder %v162, 83
    %v1374 = vsel %vm1373, %v1370, %v1372
    %v1375 = vsel %vm1373, %v1372, %v1370
    %s1376 = scalar_lea.vmem [#allocation2], 82
    %v1377 = vld [vmem:[%s1376] ss:$8 sm:$0x3]
    %s1378 = scalar_lea.vmem [#allocation2], 179
    %v1379 = vld [vmem:[%s1378] ss:$8 sm:$0x3]
    %v1381 = vperm.slane %v1377, 0
    %v1382 = vperm.slane %v1377, 1
    %v1385 = vmul.f32 %v1381, %v1374
    %v1386 = vmul.f32 %v1382, %v1375
    %v1387 = vadd.f32 %v1329, %v1385
    %v1388 = vadd.f32 %v1330, %v1386
    %v1390 = vperm.slane %v1379, 0
    %v1391 = vperm.slane %v1379, 1
    %v1394 = vmul.f32 %v1390, %v1374
    %v1395 = vmul.f32 %v1391, %v1375
    %v1396 = vadd.f32 %v1338, %v1394
    %v1397 = vadd.f32 %v1339, %v1395
    %1398 = vrot.lane.b32.xlu0 %v155, 82
    %v1399 = vpop.permute.xlu0 %1398
    %1400 = vrot.lane.b32.xlu0 %v156, 82
    %v1401 = vpop.permute.xlu0 %1400
    %vm1402 = vcmp.lt.s32.totalorder %v162, 82
    %v1403 = vsel %vm1402, %v1399, %v1401
    %v1404 = vsel %vm1402, %v1401, %v1399
    %s1405 = scalar_lea.vmem [#allocation2], 83
    %v1406 = vld [vmem:[%s1405] ss:$8 sm:$0x3]
    %s1407 = scalar_lea.vmem [#allocation2], 180
    %v1408 = vld [vmem:[%s1407] ss:$8 sm:$0x3]
    %v1410 = vperm.slane %v1406, 0
    %v1411 = vperm.slane %v1406, 1
    %v1414 = vmul.f32 %v1410, %v1403
    %v1415 = vmul.f32 %v1411, %v1404
    %v1416 = vadd.f32 %v1358, %v1414
    %v1417 = vadd.f32 %v1359, %v1415
    %v1419 = vperm.slane %v1408, 0
    %v1420 = vperm.slane %v1408, 1
    %v1423 = vmul.f32 %v1419, %v1403
    %v1424 = vmul.f32 %v1420, %v1404
    %v1425 = vadd.f32 %v1367, %v1423
    %v1426 = vadd.f32 %v1368, %v1424
    %1427 = vrot.lane.b32.xlu0 %v155, 81
    %v1428 = vpop.permute.xlu0 %1427
    %1429 = vrot.lane.b32.xlu0 %v156, 81
    %v1430 = vpop.permute.xlu0 %1429
    %vm1431 = vcmp.lt.s32.totalorder %v162, 81
    %v1432 = vsel %vm1431, %v1428, %v1430
    %v1433 = vsel %vm1431, %v1430, %v1428
    %s1434 = scalar_lea.vmem [#allocation2], 84
    %v1435 = vld [vmem:[%s1434] ss:$8 sm:$0x3]
    %s1436 = scalar_lea.vmem [#allocation2], 181
    %v1437 = vld [vmem:[%s1436] ss:$8 sm:$0x3]
    %v1439 = vperm.slane %v1435, 0
    %v1440 = vperm.slane %v1435, 1
    %v1443 = vmul.f32 %v1439, %v1432
    %v1444 = vmul.f32 %v1440, %v1433
    %v1445 = vadd.f32 %v1387, %v1443
    %v1446 = vadd.f32 %v1388, %v1444
    %v1448 = vperm.slane %v1437, 0
    %v1449 = vperm.slane %v1437, 1
    %v1452 = vmul.f32 %v1448, %v1432
    %v1453 = vmul.f32 %v1449, %v1433
    %v1454 = vadd.f32 %v1396, %v1452
    %v1455 = vadd.f32 %v1397, %v1453
    %1456 = vrot.lane.b32.xlu0 %v155, 80
    %v1457 = vpop.permute.xlu0 %1456
    %1458 = vrot.lane.b32.xlu0 %v156, 80
    %v1459 = vpop.permute.xlu0 %1458
    %vm1460 = vcmp.lt.s32.totalorder %v162, 80
    %v1461 = vsel %vm1460, %v1457, %v1459
    %v1462 = vsel %vm1460, %v1459, %v1457
    %s1463 = scalar_lea.vmem [#allocation2], 85
    %v1464 = vld [vmem:[%s1463] ss:$8 sm:$0x3]
    %s1465 = scalar_lea.vmem [#allocation2], 182
    %v1466 = vld [vmem:[%s1465] ss:$8 sm:$0x3]
    %v1468 = vperm.slane %v1464, 0
    %v1469 = vperm.slane %v1464, 1
    %v1472 = vmul.f32 %v1468, %v1461
    %v1473 = vmul.f32 %v1469, %v1462
    %v1474 = vadd.f32 %v1416, %v1472
    %v1475 = vadd.f32 %v1417, %v1473
    %v1477 = vperm.slane %v1466, 0
    %v1478 = vperm.slane %v1466, 1
    %v1481 = vmul.f32 %v1477, %v1461
    %v1482 = vmul.f32 %v1478, %v1462
    %v1483 = vadd.f32 %v1425, %v1481
    %v1484 = vadd.f32 %v1426, %v1482
    %1485 = vrot.lane.b32.xlu0 %v155, 79
    %v1486 = vpop.permute.xlu0 %1485
    %1487 = vrot.lane.b32.xlu0 %v156, 79
    %v1488 = vpop.permute.xlu0 %1487
    %vm1489 = vcmp.lt.s32.totalorder %v162, 79
    %v1490 = vsel %vm1489, %v1486, %v1488
    %v1491 = vsel %vm1489, %v1488, %v1486
    %s1492 = scalar_lea.vmem [#allocation2], 86
    %v1493 = vld [vmem:[%s1492] ss:$8 sm:$0x3]
    %s1494 = scalar_lea.vmem [#allocation2], 183
    %v1495 = vld [vmem:[%s1494] ss:$8 sm:$0x3]
    %v1497 = vperm.slane %v1493, 0
    %v1498 = vperm.slane %v1493, 1
    %v1501 = vmul.f32 %v1497, %v1490
    %v1502 = vmul.f32 %v1498, %v1491
    %v1503 = vadd.f32 %v1445, %v1501
    %v1504 = vadd.f32 %v1446, %v1502
    %v1506 = vperm.slane %v1495, 0
    %v1507 = vperm.slane %v1495, 1
    %v1510 = vmul.f32 %v1506, %v1490
    %v1511 = vmul.f32 %v1507, %v1491
    %v1512 = vadd.f32 %v1454, %v1510
    %v1513 = vadd.f32 %v1455, %v1511
    %1514 = vrot.lane.b32.xlu0 %v155, 78
    %v1515 = vpop.permute.xlu0 %1514
    %1516 = vrot.lane.b32.xlu0 %v156, 78
    %v1517 = vpop.permute.xlu0 %1516
    %vm1518 = vcmp.lt.s32.totalorder %v162, 78
    %v1519 = vsel %vm1518, %v1515, %v1517
    %v1520 = vsel %vm1518, %v1517, %v1515
    %s1521 = scalar_lea.vmem [#allocation2], 87
    %v1522 = vld [vmem:[%s1521] ss:$8 sm:$0x3]
    %s1523 = scalar_lea.vmem [#allocation2], 192
    %v1524 = vld [vmem:[%s1523] ss:$8 sm:$0x3]
    %v1526 = vperm.slane %v1522, 0
    %v1527 = vperm.slane %v1522, 1
    %v1530 = vmul.f32 %v1526, %v1519
    %v1531 = vmul.f32 %v1527, %v1520
    %v1532 = vadd.f32 %v1474, %v1530
    %v1533 = vadd.f32 %v1475, %v1531
    %v1535 = vperm.slane %v1524, 0
    %v1536 = vperm.slane %v1524, 1
    %v1539 = vmul.f32 %v1535, %v1519
    %v1540 = vmul.f32 %v1536, %v1520
    %v1541 = vadd.f32 %v1483, %v1539
    %v1542 = vadd.f32 %v1484, %v1540
    %1543 = vrot.lane.b32.xlu0 %v155, 77
    %v1544 = vpop.permute.xlu0 %1543
    %1545 = vrot.lane.b32.xlu0 %v156, 77
    %v1546 = vpop.permute.xlu0 %1545
    %vm1547 = vcmp.lt.s32.totalorder %v162, 77
    %v1548 = vsel %vm1547, %v1544, %v1546
    %v1549 = vsel %vm1547, %v1546, %v1544
    %s1550 = scalar_lea.vmem [#allocation2], 96
    %v1551 = vld [vmem:[%s1550] ss:$8 sm:$0x3]
    %s1552 = scalar_lea.vmem [#allocation2], 193
    %v1553 = vld [vmem:[%s1552] ss:$8 sm:$0x3]
    %v1555 = vperm.slane %v1551, 0
    %v1556 = vperm.slane %v1551, 1
    %v1559 = vmul.f32 %v1555, %v1548
    %v1560 = vmul.f32 %v1556, %v1549
    %v1561 = vadd.f32 %v1503, %v1559
    %v1562 = vadd.f32 %v1504, %v1560
    %v1564 = vperm.slane %v1553, 0
    %v1565 = vperm.slane %v1553, 1
    %v1568 = vmul.f32 %v1564, %v1548
    %v1569 = vmul.f32 %v1565, %v1549
    %v1570 = vadd.f32 %v1512, %v1568
    %v1571 = vadd.f32 %v1513, %v1569
    %v1572 = vadd.f32 %v1561, %v1532
    %v1573 = vadd.f32 %v1562, %v1533
    %v1574 = vadd.f32 %v1570, %v1541
    %v1575 = vadd.f32 %v1571, %v1542
    %v1578 = vrot.slane %v1574, 2
    %v1579 = vrot.slane %v1575, 2
    %v1582 = vadd.f32 %v1572, %v1578
    %v1583 = vadd.f32 %v1573, %v1579
    %v1584 = vxor.u32 %v1582, 2147483648
    %v1585 = vxor.u32 %v1583, 2147483648
    %v1586 = vmul.f32 %v1584, 1.442695
    %v1587 = vpow.pop %v1586
    %v1588 = vmul.f32 %v1585, 1.442695
    %v1589 = vpow.pop %v1588
    %v1590 = vadd.f32 %v1587, 1.0
    %v1591 = vadd.f32 %v1589, 1.0
    %v1592 = vrcp.pop %v1590
    %v1593 = vmul.f32 %v1590, %v1592
    %v1594 = vsub.f32 1.0, %v1593
    %v1595 = vmul.f32 %v1592, %v1594
    %v1596 = vadd.f32 %v1592, %v1595
    %vm1597 = vweird.f32 %v1590
    %vm1598 = vweird.f32 %v1592
    %vm1599 = vmor %vm1597, %vm1598
    %v1600 = vsel %vm1599, %v1592, %v1596
    %v1601 = vand.u32 2147483647, %v1590
    %vm1602 = vcmp.eq.f32.partialorder %v1601, 8.507059e+37
    %v1603 = vand.u32 %v1590, 2147483648
    %v1604 = vor.u32 1.1754944e-38, %v1603
    %v1605 = vsel %vm1602, %v1604, %v1600
    %v1606 = vmul.f32 1.0, %v1605
    %v1607 = vrcp.pop %v1591
    %v1608 = vmul.f32 %v1591, %v1607
    %v1609 = vsub.f32 1.0, %v1608
    %v1610 = vmul.f32 %v1607, %v1609
    %v1611 = vadd.f32 %v1607, %v1610
    %vm1612 = vweird.f32 %v1591
    %vm1613 = vweird.f32 %v1607
    %vm1614 = vmor %vm1612, %vm1613
    %v1615 = vsel %vm1614, %v1607, %v1611
    %v1616 = vand.u32 2147483647, %v1591
    %vm1617 = vcmp.eq.f32.partialorder %v1616, 8.507059e+37
    %v1618 = vand.u32 %v1591, 2147483648
    %v1619 = vor.u32 1.1754944e-38, %v1618
    %v1620 = vsel %vm1617, %v1619, %v1615
    %v1621 = vmul.f32 1.0, %v1620
    %v1624 = vrot.slane %v1621, 6
    %v1625 = vsel %vm154, %v1606, %v1624
    %1627 = vst [vmem:[#allocation7] sm:$0xf] %v1625
    // Predicated region
    $region18: #{tpu_custom_call.1} parent=1 // pred_check
      _
    $region19: #{tpu_custom_call.1} parent=1 // pred_check_branch
      %1629 = sbr.rel (0) target = $region21
    $region20: #{tpu_custom_call.1} parent=1 // pred_region
      %1631 = vsyncadd [#allocation4], 0
      %s1633 = sshll.u32 [#allocation7], 4
      %s1634 = int_to_ptr.vmem [resolvable:$true] %s1633
      %s1635 = sshll.u32 %s2, 4
      %s1636 = int_to_ptr.hbm [resolvable:$true] %s1635
      %1638 = dma.vmem_to_hbm [thread:$0]  %s1634, 64, %s1636, [#allocation4]
    $region21: #{tpu_custom_call.1} parent=1 // pred_fallthru
      _
    // Predicated region
    $region22: #{tpu_custom_call.1} parent=1 // pred_check
      _
    $region23: #{tpu_custom_call.1} parent=1 // pred_check_branch
      %1640 = sbr.rel (0) target = $region25
    $region24: #{tpu_custom_call.1} parent=1 // pred_region
      %1642 = dma.done [#allocation4], 64
    $region25: #{tpu_custom_call.1} parent=1 // pred_fallthru
      _
    %1643 = vsyncpa [#allocation3], 1
    %1644 = vsyncpa [#allocation6], 1
    %1645 = vsyncpa [#allocation4], 1

</llo_original>
